<compile_context>
chip_gen: v7x
topology: tpu7x:2x2x1
jax: 0.10.0
libtpu: 0.0.40
codegen_flags: <defaults>
</compile_context>

<pallas_src>
import functools

import jax
import jax.numpy as jnp
from jax import lax
from jax.experimental import pallas as pl
from jax.experimental.pallas import tpu as pltpu


# Rows of the packed [8, D] parameter block (rows 6-7 are padding).
_B1, _G1, _BE1, _B2, _G2, _BE2 = range(6)


def _residual_block_kernel(x_ref, w1_ref, w2_ref, p_ref, o_ref, *, eps: float):
    # ---- Linear 1 (MXU): operands in the weights' (narrow) dtype, f32 accumulate ----
    h = jnp.dot(x_ref[...].astype(w1_ref.dtype), w1_ref[...],
                preferred_element_type=jnp.float32)
    h = h + p_ref[_B1:_B1 + 1, :]

    # ---- LayerNorm 1 (f32 stats, affine folded) ----
    mu = jnp.mean(h, axis=-1, keepdims=True)
    var = jnp.mean(jnp.square(h - mu), axis=-1, keepdims=True)
    h = (h - mu) * (lax.rsqrt(var + eps) * p_ref[_G1:_G1 + 1, :]) + p_ref[_BE1:_BE1 + 1, :]

    # ---- GELU (exact erf form == torch.nn.GELU default) ----
    h = 0.5 * h * (1.0 + lax.erf(h * 0.7071067811865475))

    # ---- Dropout(p=0.05): identity in eval mode ----
    # TODO(synk): training-mode stochastic masking not implemented.

    # ---- Linear 2 (MXU) ----
    h = jnp.dot(h.astype(w2_ref.dtype), w2_ref[...],
                preferred_element_type=jnp.float32)
    h = h + p_ref[_B2:_B2 + 1, :]

    # ---- LayerNorm 2 ----
    mu2 = jnp.mean(h, axis=-1, keepdims=True)
    var2 = jnp.mean(jnp.square(h - mu2), axis=-1, keepdims=True)
    h = (h - mu2) * (lax.rsqrt(var2 + eps) * p_ref[_G2:_G2 + 1, :]) + p_ref[_BE2:_BE2 + 1, :]

    # ---- Residual add: re-read x here (short live range, full-precision add) ----
    o_ref[...] = (x_ref[...].astype(jnp.float32) + h).astype(o_ref.dtype)


def prepare_params(params, dim, *, mxu_dtype=jnp.bfloat16):
    """One-time (outside the hot path) re-layout of PyTorch-style params.

    * Linear weights [out, in] -> [in, out] so the kernel does x @ W on the MXU,
      cast once to `mxu_dtype` (bf16 is MXU-native on v5e/v6e/v7x).  Pass
      mxu_dtype=None to keep the original dtype (exact f32 matmuls).
    * The six 1-D bias / LayerNorm vectors are packed into one [8, dim] f32
      block: a single DMA + a single sublane-padded VMEM buffer.
    """
    wt = (lambda w: w.T) if mxu_dtype is None else (lambda w: w.T.astype(mxu_dtype))
    row = lambda v: v.reshape(1, dim).astype(jnp.float32)
    packed = jnp.concatenate(
        [row(params["b1"]), row(params["g1"]), row(params["beta1"]),
         row(params["b2"]), row(params["g2"]), row(params["beta2"]),
         jnp.zeros((2, dim), jnp.float32)],              # pad to 8 sublanes
        axis=0)
    return {"w1": wt(params["w1"]), "w2": wt(params["w2"]), "p": packed}


_SINGLE_BUFFER_WEIGHTS_OK = None   # cache: does pl.Buffered(1) lower on this build?


def _round_up(v, m):
    return ((v + m - 1) // m) * m


def residual_block(x, kp, *, block_b: int = 512, eps: float = 1e-5):
    """x: [B, D]. kp: output of prepare_params (kernel-layout params)."""
    global _SINGLE_BUFFER_WEIGHTS_OK
    B, D = x.shape

    itemsize = jnp.dtype(x.dtype).itemsize
    sub = {4: 8, 2: 16, 1: 32}.get(itemsize, 8)   # sublane multiple per dtype packing

    # Batch tile: as large as requested / needed, a multiple of the sublane count,
    # and (when B allows) small enough that the grid has >= 2 steps so v7x's two
    # TensorCores both get work; ragged trailing tile handled by masked DMA.
    tb = max(sub, min(_round_up(block_b, sub), _round_up(B, sub)))
    if B > sub:
        tb = min(tb, _round_up(pl.cdiv(B, 2), sub))
    grid_b = pl.cdiv(B, tb)

    w_item = jnp.dtype(kp["w1"].dtype).itemsize

    # ---- generation-aware VMEM budget (upper bound assumes double buffering) ----
    vmem_need = (2 * 2 * D * D * w_item          # two weight matrices x <=2 buffers
                 + 2 * 8 * D * 4                 # packed f32 param rows x <=2 buffers
                 + 2 * 2 * tb * D * itemsize)    # x and out tiles, double-buffered
    try:
        vmem_cap = pltpu.get_tpu_info().vmem_capacity_bytes
    except Exception:
        vmem_cap = 64 << 20                      # v7x per-TC VMEM (smallest of the fleet)
    vmem_limit = int(min(max(vmem_need + (4 << 20), 32 << 20), vmem_cap - (8 << 20)))
    # TODO(synk): if vmem_need exceeds the cap (very large D), switch to the
    #             K/N-tiled variant instead of full-weight residency.

    # ---- advisory cost estimate for XLA's scheduler ----
    flops = 4 * grid_b * tb * D * D + 12 * B * D           # 2 matmuls + epilogue
    bytes_accessed = 2 * B * D * itemsize + 2 * D * D * w_item + 8 * D * 4
    cost = pl.CostEstimate(flops=flops, transcendentals=B * D,
                           bytes_accessed=bytes_accessed)

    x_spec = pl.BlockSpec((tb, D), lambda i: (i, 0))

    def call(single_buffer_weights):
        if single_buffer_weights:
            # Grid-invariant operands (constant index_map): never re-fetched, so a
            # single buffer suffices — halves weight-resident VMEM.
            w_spec = pl.BlockSpec((D, D), lambda i: (0, 0), pipeline_mode=pl.Buffered(1))
            p_spec = pl.BlockSpec((8, D), lambda i: (0, 0), pipeline_mode=pl.Buffered(1))
        else:
            w_spec = pl.BlockSpec((D, D), lambda i: (0, 0))
            p_spec = pl.BlockSpec((8, D), lambda i: (0, 0))
        return pl.pallas_call(
            functools.partial(_residual_block_kernel, eps=eps),
            out_shape=jax.ShapeDtypeStruct((B, D), x.dtype),
            grid_spec=pltpu.PrefetchScalarGridSpec(
                num_scalar_prefetch=0,
                grid=(grid_b,),
                in_specs=[x_spec, w_spec, w_spec, p_spec],
                out_specs=x_spec,
            ),
            compiler_params=pltpu.CompilerParams(
                dimension_semantics=("parallel",),
                vmem_limit_bytes=vmem_limit,
            ),
            cost_estimate=cost,
        )(x, kp["w1"], kp["w2"], kp["p"])

    if _SINGLE_BUFFER_WEIGHTS_OK is None:
        try:
            out = jax.block_until_ready(call(True))
            _SINGLE_BUFFER_WEIGHTS_OK = True
        except Exception:
            _SINGLE_BUFFER_WEIGHTS_OK = False
            out = call(False)
    else:
        out = call(_SINGLE_BUFFER_WEIGHTS_OK)
    return out


def _reference(x, params, eps=1e-5):
    """Pure-JAX reference mirroring the PyTorch module (eval mode, f32)."""
    h = x @ params["w1"].T + params["b1"]
    mu = h.mean(-1, keepdims=True)
    var = ((h - mu) ** 2).mean(-1, keepdims=True)
    h = (h - mu) / jnp.sqrt(var + eps) * params["g1"] + params["beta1"]
    h = 0.5 * h * (1.0 + lax.erf(h / jnp.sqrt(2.0)))
    h = h @ params["w2"].T + params["b2"]
    mu2 = h.mean(-1, keepdims=True)
    var2 = ((h - mu2) ** 2).mean(-1, keepdims=True)
    h = (h - mu2) / jnp.sqrt(var2 + eps) * params["g2"] + params["beta2"]
    return x + h


if __name__ == "__main__":
    # Small, module-consistent shapes; B is deliberately not a tile multiple to
    # exercise the ragged (masked) last tile and the >=2-step grid.
    B, D = 20, 128

    key = jax.random.PRNGKey(0)
    k_x, k_w1, k_b1, k_w2, k_b2 = jax.random.split(key, 5)

    x = jax.random.normal(k_x, (B, D), dtype=jnp.float32)

    bound = float(D) ** -0.5
    params = {
        # nn.Linear(dim, dim): weight [out, in], bias [out]
        "w1": jax.random.uniform(k_w1, (D, D), jnp.float32, -bound, bound),
        "b1": jax.random.uniform(k_b1, (D,), jnp.float32, -bound, bound),
        "w2": jax.random.uniform(k_w2, (D, D), jnp.float32, -bound, bound),
        "b2": jax.random.uniform(k_b2, (D,), jnp.float32, -bound, bound),
        # nn.LayerNorm(dim) default init: gamma=1, beta=0
        "g1": jnp.ones((D,), jnp.float32),
        "beta1": jnp.zeros((D,), jnp.float32),
        "g2": jnp.ones((D,), jnp.float32),
        "beta2": jnp.zeros((D,), jnp.float32),
    }

    ref = _reference(x, params)

    # (1) exact path: f32 MXU operands, matches the f32 PyTorch math tightly.
    kp_f32 = prepare_params(params, D, mxu_dtype=None)
    out_f32 = jax.block_until_ready(residual_block(x, kp_f32))
    assert out_f32.shape == (B, D)
    err_f32 = float(jnp.max(jnp.abs(out_f32 - ref)))
    assert jnp.allclose(out_f32, ref, atol=1e-4, rtol=1e-4), f"f32 path max err {err_f32}"

    # (2) fast path (default): bf16 MXU operands, f32 accumulate + f32 LN/GELU.
    kp_bf16 = prepare_params(params, D)
    out_bf16 = jax.block_until_ready(residual_block(x, kp_bf16))
    assert out_bf16.shape == (B, D)
    err_bf16 = float(jnp.max(jnp.abs(out_bf16 - ref)))
    assert jnp.allclose(out_bf16, ref, atol=3e-2, rtol=3e-2), f"bf16 path max err {err_bf16}"

    print("KERNEL_OK")
</pallas_src>

<mosaic_0001>
module attributes {stable_mosaic.version = 11 : i64} {
  func.func @_residual_block_kernel(%arg0: i32, %arg1: memref<16x128xf32, #tpu.memory_space<vmem>>, %arg2: memref<128x128xf32, #tpu.memory_space<vmem>>, %arg3: memref<128x128xf32, #tpu.memory_space<vmem>>, %arg4: memref<8x128xf32, #tpu.memory_space<vmem>>, %arg5: memref<16x128xf32, #tpu.memory_space<vmem>>) attributes {dimension_semantics = [#tpu.dimension_semantics<parallel>], iteration_bounds = array<i64: 2>, scalar_prefetch = 0 : i64, scratch_operands = 0 : i64, tpu.core_type = #tpu.core_type<tc>, window_params = [{transform_indices = @transform_0, window_bounds = array<i64: 16, 128>}, {pipeline_mode = #tpu.pipeline_mode<synchronous>, transform_indices = @transform_1, window_bounds = array<i64: 128, 128>}, {pipeline_mode = #tpu.pipeline_mode<synchronous>, transform_indices = @transform_2, window_bounds = array<i64: 128, 128>}, {pipeline_mode = #tpu.pipeline_mode<synchronous>, transform_indices = @transform_3, window_bounds = array<i64: 8, 128>}, {transform_indices = @transform_4, window_bounds = array<i64: 16, 128>}]} {
    %c0 = arith.constant 0 : index
    %c0_0 = arith.constant 0 : index
    %0 = vector.load %arg1[%c0, %c0_0] : memref<16x128xf32, #tpu.memory_space<vmem>>, vector<16x128xf32>
    %c0_1 = arith.constant 0 : index
    %c0_2 = arith.constant 0 : index
    %1 = vector.load %arg2[%c0_1, %c0_2] : memref<128x128xf32, #tpu.memory_space<vmem>>, vector<128x128xf32>
    %cst = arith.constant dense<0.000000e+00> : vector<16x128xf32>
    %2 = tpu.matmul %0, %1, %cst {dimension_numbers = #tpu.dot_dimension_numbers<[1], [0], [0], [1], [0, 0, 1, 1], [], []>} : vector<16x128xf32>, vector<128x128xf32>, vector<16x128xf32> -> vector<16x128xf32>
    %c0_3 = arith.constant 0 : index
    %c0_4 = arith.constant 0 : index
    %3 = vector.load %arg4[%c0_3, %c0_4] : memref<8x128xf32, #tpu.memory_space<vmem>>, vector<1x128xf32>
    %4 = vector.broadcast %3 : vector<1x128xf32> to vector<16x128xf32>
    %5 = arith.addf %2, %4 : vector<16x128xf32>
    %cst_5 = arith.constant dense<0.000000e+00> : vector<16xf32>
    %6 = vector.multi_reduction <add>, %5, %cst_5 [1] : vector<16x128xf32> to vector<16xf32>
    %7 = vector.shape_cast %6 : vector<16xf32> to vector<16x1xf32>
    %cst_6 = arith.constant 1.280000e+02 : f32
    %8 = vector.broadcast %cst_6 : f32 to vector<16x1xf32>
    %9 = arith.divf %7, %8 : vector<16x1xf32>
    %10 = vector.broadcast %9 : vector<16x1xf32> to vector<16x128xf32>
    %11 = arith.subf %5, %10 : vector<16x128xf32>
    %12 = arith.mulf %11, %11 : vector<16x128xf32>
    %cst_7 = arith.constant dense<0.000000e+00> : vector<16xf32>
    %13 = vector.multi_reduction <add>, %12, %cst_7 [1] : vector<16x128xf32> to vector<16xf32>
    %14 = vector.shape_cast %13 : vector<16xf32> to vector<16x1xf32>
    %cst_8 = arith.constant 1.280000e+02 : f32
    %15 = vector.broadcast %cst_8 : f32 to vector<16x1xf32>
    %16 = arith.divf %14, %15 : vector<16x1xf32>
    %17 = vector.broadcast %9 : vector<16x1xf32> to vector<16x128xf32>
    %18 = arith.subf %5, %17 : vector<16x128xf32>
    %cst_9 = arith.constant 9.99999974E-6 : f32
    %19 = vector.broadcast %cst_9 : f32 to vector<16x1xf32>
    %20 = arith.addf %16, %19 : vector<16x1xf32>
    %21 = math.rsqrt %20 : vector<16x1xf32>
    %c1 = arith.constant 1 : index
    %c0_10 = arith.constant 0 : index
    %22 = vector.load %arg4[%c1, %c0_10] : memref<8x128xf32, #tpu.memory_space<vmem>>, vector<1x128xf32>
    %23 = vector.broadcast %21 : vector<16x1xf32> to vector<16x128xf32>
    %24 = vector.broadcast %22 : vector<1x128xf32> to vector<16x128xf32>
    %25 = arith.mulf %23, %24 : vector<16x128xf32>
    %26 = arith.mulf %18, %25 : vector<16x128xf32>
    %c2 = arith.constant 2 : index
    %c0_11 = arith.constant 0 : index
    %27 = vector.load %arg4[%c2, %c0_11] : memref<8x128xf32, #tpu.memory_space<vmem>>, vector<1x128xf32>
    %28 = vector.broadcast %27 : vector<1x128xf32> to vector<16x128xf32>
    %29 = arith.addf %26, %28 : vector<16x128xf32>
    %cst_12 = arith.constant 5.000000e-01 : f32
    %30 = vector.broadcast %cst_12 : f32 to vector<16x128xf32>
    %31 = arith.mulf %30, %29 : vector<16x128xf32>
    %cst_13 = arith.constant 0.707106769 : f32
    %32 = vector.broadcast %cst_13 : f32 to vector<16x128xf32>
    %33 = arith.mulf %29, %32 : vector<16x128xf32>
    %34 = math.erf %33 : vector<16x128xf32>
    %cst_14 = arith.constant 1.000000e+00 : f32
    %35 = vector.broadcast %cst_14 : f32 to vector<16x128xf32>
    %36 = arith.addf %35, %34 : vector<16x128xf32>
    %37 = arith.mulf %31, %36 : vector<16x128xf32>
    %c0_15 = arith.constant 0 : index
    %c0_16 = arith.constant 0 : index
    %38 = vector.load %arg3[%c0_15, %c0_16] : memref<128x128xf32, #tpu.memory_space<vmem>>, vector<128x128xf32>
    %cst_17 = arith.constant dense<0.000000e+00> : vector<16x128xf32>
    %39 = tpu.matmul %37, %38, %cst_17 {dimension_numbers = #tpu.dot_dimension_numbers<[1], [0], [0], [1], [0, 0, 1, 1], [], []>} : vector<16x128xf32>, vector<128x128xf32>, vector<16x128xf32> -> vector<16x128xf32>
    %c3 = arith.constant 3 : index
    %c0_18 = arith.constant 0 : index
    %40 = vector.load %arg4[%c3, %c0_18] : memref<8x128xf32, #tpu.memory_space<vmem>>, vector<1x128xf32>
    %41 = vector.broadcast %40 : vector<1x128xf32> to vector<16x128xf32>
    %42 = arith.addf %39, %41 : vector<16x128xf32>
    %cst_19 = arith.constant dense<0.000000e+00> : vector<16xf32>
    %43 = vector.multi_reduction <add>, %42, %cst_19 [1] : vector<16x128xf32> to vector<16xf32>
    %44 = vector.shape_cast %43 : vector<16xf32> to vector<16x1xf32>
    %cst_20 = arith.constant 1.280000e+02 : f32
    %45 = vector.broadcast %cst_20 : f32 to vector<16x1xf32>
    %46 = arith.divf %44, %45 : vector<16x1xf32>
    %47 = vector.broadcast %46 : vector<16x1xf32> to vector<16x128xf32>
    %48 = arith.subf %42, %47 : vector<16x128xf32>
    %49 = arith.mulf %48, %48 : vector<16x128xf32>
    %cst_21 = arith.constant dense<0.000000e+00> : vector<16xf32>
    %50 = vector.multi_reduction <add>, %49, %cst_21 [1] : vector<16x128xf32> to vector<16xf32>
    %51 = vector.shape_cast %50 : vector<16xf32> to vector<16x1xf32>
    %cst_22 = arith.constant 1.280000e+02 : f32
    %52 = vector.broadcast %cst_22 : f32 to vector<16x1xf32>
    %53 = arith.divf %51, %52 : vector<16x1xf32>
    %54 = vector.broadcast %46 : vector<16x1xf32> to vector<16x128xf32>
    %55 = arith.subf %42, %54 : vector<16x128xf32>
    %cst_23 = arith.constant 9.99999974E-6 : f32
    %56 = vector.broadcast %cst_23 : f32 to vector<16x1xf32>
    %57 = arith.addf %53, %56 : vector<16x1xf32>
    %58 = math.rsqrt %57 : vector<16x1xf32>
    %c4 = arith.constant 4 : index
    %c0_24 = arith.constant 0 : index
    %59 = vector.load %arg4[%c4, %c0_24] : memref<8x128xf32, #tpu.memory_space<vmem>>, vector<1x128xf32>
    %60 = vector.broadcast %58 : vector<16x1xf32> to vector<16x128xf32>
    %61 = vector.broadcast %59 : vector<1x128xf32> to vector<16x128xf32>
    %62 = arith.mulf %60, %61 : vector<16x128xf32>
    %63 = arith.mulf %55, %62 : vector<16x128xf32>
    %c5 = arith.constant 5 : index
    %c0_25 = arith.constant 0 : index
    %64 = vector.load %arg4[%c5, %c0_25] : memref<8x128xf32, #tpu.memory_space<vmem>>, vector<1x128xf32>
    %65 = vector.broadcast %64 : vector<1x128xf32> to vector<16x128xf32>
    %66 = arith.addf %63, %65 : vector<16x128xf32>
    %c0_26 = arith.constant 0 : index
    %c0_27 = arith.constant 0 : index
    %67 = vector.load %arg1[%c0_26, %c0_27] : memref<16x128xf32, #tpu.memory_space<vmem>>, vector<16x128xf32>
    %68 = arith.addf %67, %66 : vector<16x128xf32>
    %c0_28 = arith.constant 0 : index
    %c0_29 = arith.constant 0 : index
    %69 = vector.load %arg5[%c0_28, %c0_29] : memref<16x128xf32, #tpu.memory_space<vmem>>, vector<16x128xf32>
    tpu.vector_store %arg5[%c0_28, %c0_29], %68 {strides = array<i32>} : memref<16x128xf32, #tpu.memory_space<vmem>>, vector<16x128xf32>,
    return
  }
  func.func @transform_0(%arg0: i32) -> (i32, i32) {
    %c0_i32 = arith.constant 0 : i32
    %c0_i32_0 = arith.constant 0 : i32
    return %arg0, %c0_i32 : i32, i32
  }
  func.func @transform_1(%arg0: i32) -> (i32, i32) {
    %c0_i32 = arith.constant 0 : i32
    %c0_i32_0 = arith.constant 0 : i32
    %c0_i32_1 = arith.constant 0 : i32
    return %c0_i32, %c0_i32_0 : i32, i32
  }
  func.func @transform_2(%arg0: i32) -> (i32, i32) {
    %c0_i32 = arith.constant 0 : i32
    %c0_i32_0 = arith.constant 0 : i32
    %c0_i32_1 = arith.constant 0 : i32
    return %c0_i32, %c0_i32_0 : i32, i32
  }
  func.func @transform_3(%arg0: i32) -> (i32, i32) {
    %c0_i32 = arith.constant 0 : i32
    %c0_i32_0 = arith.constant 0 : i32
    %c0_i32_1 = arith.constant 0 : i32
    return %c0_i32, %c0_i32_0 : i32, i32
  }
  func.func @transform_4(%arg0: i32) -> (i32, i32) {
    %c0_i32 = arith.constant 0 : i32
    %c0_i32_0 = arith.constant 0 : i32
    return %arg0, %c0_i32 : i32, i32
  }
}

module attributes {stable_mosaic.version = 11 : i64} {
  func.func @_residual_block_kernel(%arg0: i32, %arg1: memref<16x128xf32, #tpu.memory_space<vmem>>, %arg2: memref<128x128xf32, #tpu.memory_space<vmem>>, %arg3: memref<128x128xf32, #tpu.memory_space<vmem>>, %arg4: memref<8x128xf32, #tpu.memory_space<vmem>>, %arg5: memref<16x128xf32, #tpu.memory_space<vmem>>) attributes {dimension_semantics = [#tpu.dimension_semantics<parallel>], iteration_bounds = array<i64: 2>, scalar_prefetch = 0 : i64, scratch_operands = 0 : i64, tpu.core_type = #tpu.core_type<tc>, window_params = [{transform_indices = @transform_0, window_bounds = array<i64: 16, 128>}, {pipeline_mode = #tpu.pipeline_mode<synchronous>, transform_indices = @transform_1, window_bounds = array<i64: 128, 128>}, {pipeline_mode = #tpu.pipeline_mode<synchronous>, transform_indices = @transform_2, window_bounds = array<i64: 128, 128>}, {pipeline_mode = #tpu.pipeline_mode<synchronous>, transform_indices = @transform_3, window_bounds = array<i64: 8, 128>}, {transform_indices = @transform_4, window_bounds = array<i64: 16, 128>}]} {
    %c0 = arith.constant 0 : index
    %c0_0 = arith.constant 0 : index
    %0 = vector.load %arg1[%c0, %c0_0] : memref<16x128xf32, #tpu.memory_space<vmem>>, vector<16x128xf32>
    %c0_1 = arith.constant 0 : index
    %c0_2 = arith.constant 0 : index
    %1 = vector.load %arg2[%c0_1, %c0_2] : memref<128x128xf32, #tpu.memory_space<vmem>>, vector<128x128xf32>
    %cst = arith.constant dense<0.000000e+00> : vector<16x128xf32>
    %2 = tpu.matmul %0, %1, %cst {dimension_numbers = #tpu.dot_dimension_numbers<[1], [0], [0], [1], [0, 0, 1, 1], [], []>} : vector<16x128xf32>, vector<128x128xf32>, vector<16x128xf32> -> vector<16x128xf32>
    %c0_3 = arith.constant 0 : index
    %c0_4 = arith.constant 0 : index
    %3 = vector.load %arg4[%c0_3, %c0_4] : memref<8x128xf32, #tpu.memory_space<vmem>>, vector<1x128xf32>
    %4 = vector.broadcast %3 : vector<1x128xf32> to vector<16x128xf32>
    %5 = arith.addf %2, %4 : vector<16x128xf32>
    %cst_5 = arith.constant dense<0.000000e+00> : vector<16xf32>
    %6 = vector.multi_reduction <add>, %5, %cst_5 [1] : vector<16x128xf32> to vector<16xf32>
    %7 = vector.shape_cast %6 : vector<16xf32> to vector<16x1xf32>
    %cst_6 = arith.constant 1.280000e+02 : f32
    %8 = vector.broadcast %cst_6 : f32 to vector<16x1xf32>
    %9 = arith.divf %7, %8 : vector<16x1xf32>
    %10 = vector.broadcast %9 : vector<16x1xf32> to vector<16x128xf32>
    %11 = arith.subf %5, %10 : vector<16x128xf32>
    %12 = arith.mulf %11, %11 : vector<16x128xf32>
    %cst_7 = arith.constant dense<0.000000e+00> : vector<16xf32>
    %13 = vector.multi_reduction <add>, %12, %cst_7 [1] : vector<16x128xf32> to vector<16xf32>
    %14 = vector.shape_cast %13 : vector<16xf32> to vector<16x1xf32>
    %cst_8 = arith.constant 1.280000e+02 : f32
    %15 = vector.broadcast %cst_8 : f32 to vector<16x1xf32>
    %16 = arith.divf %14, %15 : vector<16x1xf32>
    %17 = vector.broadcast %9 : vector<16x1xf32> to vector<16x128xf32>
    %18 = arith.subf %5, %17 : vector<16x128xf32>
    %cst_9 = arith.constant 9.99999974E-6 : f32
    %19 = vector.broadcast %cst_9 : f32 to vector<16x1xf32>
    %20 = arith.addf %16, %19 : vector<16x1xf32>
    %21 = math.rsqrt %20 : vector<16x1xf32>
    %c1 = arith.constant 1 : index
    %c0_10 = arith.constant 0 : index
    %22 = vector.load %arg4[%c1, %c0_10] : memref<8x128xf32, #tpu.memory_space<vmem>>, vector<1x128xf32>
    %23 = vector.broadcast %21 : vector<16x1xf32> to vector<16x128xf32>
    %24 = vector.broadcast %22 : vector<1x128xf32> to vector<16x128xf32>
    %25 = arith.mulf %23, %24 : vector<16x128xf32>
    %26 = arith.mulf %18, %25 : vector<16x128xf32>
    %c2 = arith.constant 2 : index
    %c0_11 = arith.constant 0 : index
    %27 = vector.load %arg4[%c2, %c0_11] : memref<8x128xf32, #tpu.memory_space<vmem>>, vector<1x128xf32>
    %28 = vector.broadcast %27 : vector<1x128xf32> to vector<16x128xf32>
    %29 = arith.addf %26, %28 : vector<16x128xf32>
    %cst_12 = arith.constant 5.000000e-01 : f32
    %30 = vector.broadcast %cst_12 : f32 to vector<16x128xf32>
    %31 = arith.mulf %30, %29 : vector<16x128xf32>
    %cst_13 = arith.constant 0.707106769 : f32
    %32 = vector.broadcast %cst_13 : f32 to vector<16x128xf32>
    %33 = arith.mulf %29, %32 : vector<16x128xf32>
    %34 = math.erf %33 : vector<16x128xf32>
    %cst_14 = arith.constant 1.000000e+00 : f32
    %35 = vector.broadcast %cst_14 : f32 to vector<16x128xf32>
    %36 = arith.addf %35, %34 : vector<16x128xf32>
    %37 = arith.mulf %31, %36 : vector<16x128xf32>
    %c0_15 = arith.constant 0 : index
    %c0_16 = arith.constant 0 : index
    %38 = vector.load %arg3[%c0_15, %c0_16] : memref<128x128xf32, #tpu.memory_space<vmem>>, vector<128x128xf32>
    %cst_17 = arith.constant dense<0.000000e+00> : vector<16x128xf32>
    %39 = tpu.matmul %37, %38, %cst_17 {dimension_numbers = #tpu.dot_dimension_numbers<[1], [0], [0], [1], [0, 0, 1, 1], [], []>} : vector<16x128xf32>, vector<128x128xf32>, vector<16x128xf32> -> vector<16x128xf32>
    %c3 = arith.constant 3 : index
    %c0_18 = arith.constant 0 : index
    %40 = vector.load %arg4[%c3, %c0_18] : memref<8x128xf32, #tpu.memory_space<vmem>>, vector<1x128xf32>
    %41 = vector.broadcast %40 : vector<1x128xf32> to vector<16x128xf32>
    %42 = arith.addf %39, %41 : vector<16x128xf32>
    %cst_19 = arith.constant dense<0.000000e+00> : vector<16xf32>
    %43 = vector.multi_reduction <add>, %42, %cst_19 [1] : vector<16x128xf32> to vector<16xf32>
    %44 = vector.shape_cast %43 : vector<16xf32> to vector<16x1xf32>
    %cst_20 = arith.constant 1.280000e+02 : f32
    %45 = vector.broadcast %cst_20 : f32 to vector<16x1xf32>
    %46 = arith.divf %44, %45 : vector<16x1xf32>
    %47 = vector.broadcast %46 : vector<16x1xf32> to vector<16x128xf32>
    %48 = arith.subf %42, %47 : vector<16x128xf32>
    %49 = arith.mulf %48, %48 : vector<16x128xf32>
    %cst_21 = arith.constant dense<0.000000e+00> : vector<16xf32>
    %50 = vector.multi_reduction <add>, %49, %cst_21 [1] : vector<16x128xf32> to vector<16xf32>
    %51 = vector.shape_cast %50 : vector<16xf32> to vector<16x1xf32>
    %cst_22 = arith.constant 1.280000e+02 : f32
    %52 = vector.broadcast %cst_22 : f32 to vector<16x1xf32>
    %53 = arith.divf %51, %52 : vector<16x1xf32>
    %54 = vector.broadcast %46 : vector<16x1xf32> to vector<16x128xf32>
    %55 = arith.subf %42, %54 : vector<16x128xf32>
    %cst_23 = arith.constant 9.99999974E-6 : f32
    %56 = vector.broadcast %cst_23 : f32 to vector<16x1xf32>
    %57 = arith.addf %53, %56 : vector<16x1xf32>
    %58 = math.rsqrt %57 : vector<16x1xf32>
    %c4 = arith.constant 4 : index
    %c0_24 = arith.constant 0 : index
    %59 = vector.load %arg4[%c4, %c0_24] : memref<8x128xf32, #tpu.memory_space<vmem>>, vector<1x128xf32>
    %60 = vector.broadcast %58 : vector<16x1xf32> to vector<16x128xf32>
    %61 = vector.broadcast %59 : vector<1x128xf32> to vector<16x128xf32>
    %62 = arith.mulf %60, %61 : vector<16x128xf32>
    %63 = arith.mulf %55, %62 : vector<16x128xf32>
    %c5 = arith.constant 5 : index
    %c0_25 = arith.constant 0 : index
    %64 = vector.load %arg4[%c5, %c0_25] : memref<8x128xf32, #tpu.memory_space<vmem>>, vector<1x128xf32>
    %65 = vector.broadcast %64 : vector<1x128xf32> to vector<16x128xf32>
    %66 = arith.addf %63, %65 : vector<16x128xf32>
    %c0_26 = arith.constant 0 : index
    %c0_27 = arith.constant 0 : index
    %67 = vector.load %arg1[%c0_26, %c0_27] : memref<16x128xf32, #tpu.memory_space<vmem>>, vector<16x128xf32>
    %68 = arith.addf %67, %66 : vector<16x128xf32>
    %c0_28 = arith.constant 0 : index
    %c0_29 = arith.constant 0 : index
    %69 = vector.load %arg5[%c0_28, %c0_29] : memref<16x128xf32, #tpu.memory_space<vmem>>, vector<16x128xf32>
    tpu.vector_store %arg5[%c0_28, %c0_29], %68 {strides = array<i32>} : memref<16x128xf32, #tpu.memory_space<vmem>>, vector<16x128xf32>,
    return
  }
  func.func @transform_0(%arg0: i32) -> (i32, i32) {
    %c0_i32 = arith.constant 0 : i32
    %c0_i32_0 = arith.constant 0 : i32
    return %arg0, %c0_i32 : i32, i32
  }
  func.func @transform_1(%arg0: i32) -> (i32, i32) {
    %c0_i32 = arith.constant 0 : i32
    %c0_i32_0 = arith.constant 0 : i32
    %c0_i32_1 = arith.constant 0 : i32
    return %c0_i32, %c0_i32_0 : i32, i32
  }
  func.func @transform_2(%arg0: i32) -> (i32, i32) {
    %c0_i32 = arith.constant 0 : i32
    %c0_i32_0 = arith.constant 0 : i32
    %c0_i32_1 = arith.constant 0 : i32
    return %c0_i32, %c0_i32_0 : i32, i32
  }
  func.func @transform_3(%arg0: i32) -> (i32, i32) {
    %c0_i32 = arith.constant 0 : i32
    %c0_i32_0 = arith.constant 0 : i32
    %c0_i32_1 = arith.constant 0 : i32
    return %c0_i32, %c0_i32_0 : i32, i32
  }
  func.func @transform_4(%arg0: i32) -> (i32, i32) {
    %c0_i32 = arith.constant 0 : i32
    %c0_i32_0 = arith.constant 0 : i32
    return %arg0, %c0_i32 : i32, i32
  }
}

</mosaic_0001>

<llo_original>
// kernel: tpu_custom_call.1
$region0: #{tpu_custom_call.1}
  #allocation0 [shape = 'u32[]', space=smem, size = 0x4, offset = 0x4, fixed_abs, tag = 'smem constant byte address 0x4 - core index']
  #allocation1 [shape = 'u32[144,128]{1,0:T(1,128)}', space=vmem, size = 0x12000, scoped, tag = 'internal scratch']
  %s0 = inlined_call_operand.hbm [shape: f32[20,128], index: 0, kind: input, shape index: {}]
  %s1 = inlined_call_operand.hbm [shape: f32[128,128], index: 1, kind: input, shape index: {}]
  %s2 = inlined_call_operand.hbm [shape: f32[128,128], index: 2, kind: input, shape index: {}]
  %s3 = inlined_call_operand.vmem [shape: f32[8,128], index: 3, kind: input, shape index: {}]
  %s4 = inlined_call_operand.hbm [shape: f32[20,128], index: 4, kind: output, shape index: {}]
  %s5 = sld [smem:[#allocation0]]
  $region61: #{tpu_custom_call.1} parent=0
    _
  %s7 = ssub.s32 1, %s5
  %s8 = scalar_select 0, %s7, %s5
  $region1: #{tpu_custom_call.1} parent=0
    #allocation2 [shape = 'u8[16384]{0}', space=vmem, size = 0x4000, scoped, tag = 'input window, operand 0']
    #allocation3 [shape = 's32[2]{0}', space=sflag, size = 0x8, scoped, tag = 'scoped memory for tpu_custom_call.1']
    #allocation4 [shape = 's32[2]{0}', space=sflag, size = 0x8, scoped, tag = 'scoped memory for tpu_custom_call.1']
    #allocation5 [shape = 'u8[65536]{0}', space=vmem, size = 0x10000, scoped, tag = 'input window, operand 1, single buffered']
    #allocation6 [shape = 's32[1]{0}', space=sflag, size = 0x4, scoped, tag = 'scoped memory for tpu_custom_call.1']
    #allocation7 [shape = 'u8[65536]{0}', space=vmem, size = 0x10000, scoped, tag = 'input window, operand 2, single buffered']
    #allocation8 [shape = 'u8[16384]{0}', space=vmem, size = 0x4000, scoped, tag = 'output window, operand 0']
    %9 = vsyncpa [#allocation3], 0
    %s10 = scalar_lea.sflag [#allocation3], 1
    %11 = vsyncpa %s10, 0
    %12 = vsyncpa [#allocation6], 0
    %13 = vsyncpa [#allocation4], 0
    %s14 = scalar_lea.sflag [#allocation4], 1
    %15 = vsyncpa %s14, 0
    loop: start=0, step=1, limit=4
    $region2: #{tpu_custom_call.1} parent=1 // loop_pre_header
      _
    $region3: #{tpu_custom_call.1} parent=1 // loop_header
      %s17 = sphi 0, %s21
      %p18 = scmp.ge.s32.totalorder %s17, 4
      %s27 = sphi 0, %s29
      %s30 = sphi 0, %s27
      %s31 = sphi 0, %s30
      %s47 = sphi 0, %s31
      %s51 = sphi 0, %s51
      %s53 = sphi 0, %s51
      %s54 = sphi 0, %s53
      %s68 = sphi 0, %s54
      %s72 = sphi 0, %s72
      %s74 = sphi 0, %s72
      %s75 = sphi 0, %s74
      %s89 = sphi 0, %s75
      %s93 = sphi 0, %s93
      %s95 = sphi 0, %s93
      %s96 = sphi 0, %s95
      %s110 = sphi 0, %s96
      %s116 = sphi 0, %s118
      %s119 = sphi 0, %s116
      %s120 = sphi 0, %s119
      %s136 = sphi 0, %s120
    $region4: #{tpu_custom_call.1} parent=1 // loop_header_branch
      %20 = sbr.rel (%p18) target = $region8
    $region5: #{tpu_custom_call.1} parent=1 // loop_body
      %s22 = ssub.s32 %s17, 1
      %s23 = ssub.s32 %s17, 2
      %s24 = sadd.s32 %s17, 1
      %s25 = ssub.s32 %s17, %s24
      %p26 = scmp.eq.s32.totalorder %s25, 0
      %s28 = sadd.s32 %s27, 1
      %s29 = scalar_select %p26, %s27, %s28
      %p32 = pneg %p26
      %p33 = scmp.eq.s32.totalorder %s17, 1
      %p34 = por %p32, %p33
      %p35 = scmp.ne.s32.totalorder %s27, %s30
      %p36 = scmp.eq.s32.totalorder %s17, 0
      %p37 = por %p35, %p36
      %p38 = scmp.ne.s32.totalorder %s27, %s30
      %p39 = scmp.eq.s32.totalorder %s22, 1
      %p40 = por %p38, %p39
      %p41 = scmp.ne.s32.totalorder %s30, %s31
      %p42 = scmp.eq.s32.totalorder %s22, 0
      %p43 = por %p41, %p42
      %p44 = scmp.ne.s32.totalorder %s30, %s31
      %p45 = scmp.eq.s32.totalorder %s23, 1
      %p46 = por %p44, %p45
      %p48 = scmp.ne.s32.totalorder %s31, %s47
      %p49 = scmp.eq.s32.totalorder %s23, 0
      %p50 = por %p48, %p49
      %s52 = sadd.s32 %s51, 1
      %p55 = scmp.eq.s32.totalorder %s17, 1
      %p56 = scmp.ne.s32.totalorder %s51, %s53
      %p57 = scmp.eq.s32.totalorder %s17, 0
      %p58 = por %p56, %p57
      %p59 = scmp.ne.s32.totalorder %s51, %s53
      %p60 = scmp.eq.s32.totalorder %s22, 1
      %p61 = por %p59, %p60
      %p62 = scmp.ne.s32.totalorder %s53, %s54
      %p63 = scmp.eq.s32.totalorder %s22, 0
      %p64 = por %p62, %p63
      %p65 = scmp.ne.s32.totalorder %s53, %s54
      %p66 = scmp.eq.s32.totalorder %s23, 1
      %p67 = por %p65, %p66
      %p69 = scmp.ne.s32.totalorder %s54, %s68
      %p70 = scmp.eq.s32.totalorder %s23, 0
      %p71 = por %p69, %p70
      %s73 = sadd.s32 %s72, 1
      %p76 = scmp.eq.s32.totalorder %s17, 1
      %p77 = scmp.ne.s32.totalorder %s72, %s74
      %p78 = scmp.eq.s32.totalorder %s17, 0
      %p79 = por %p77, %p78
      %p80 = scmp.ne.s32.totalorder %s72, %s74
      %p81 = scmp.eq.s32.totalorder %s22, 1
      %p82 = por %p80, %p81
      %p83 = scmp.ne.s32.totalorder %s74, %s75
      %p84 = scmp.eq.s32.totalorder %s22, 0
      %p85 = por %p83, %p84
      %p86 = scmp.ne.s32.totalorder %s74, %s75
      %p87 = scmp.eq.s32.totalorder %s23, 1
      %p88 = por %p86, %p87
      %p90 = scmp.ne.s32.totalorder %s75, %s89
      %p91 = scmp.eq.s32.totalorder %s23, 0
      %p92 = por %p90, %p91
      %s94 = sadd.s32 %s93, 1
      %p97 = scmp.eq.s32.totalorder %s17, 1
      %p98 = scmp.ne.s32.totalorder %s93, %s95
      %p99 = scmp.eq.s32.totalorder %s17, 0
      %p100 = por %p98, %p99
      %p101 = scmp.ne.s32.totalorder %s93, %s95
      %p102 = scmp.eq.s32.totalorder %s22, 1
      %p103 = por %p101, %p102
      %p104 = scmp.ne.s32.totalorder %s95, %s96
      %p105 = scmp.eq.s32.totalorder %s22, 0
      %p106 = por %p104, %p105
      %p107 = scmp.ne.s32.totalorder %s95, %s96
      %p108 = scmp.eq.s32.totalorder %s23, 1
      %p109 = por %p107, %p108
      %p111 = scmp.ne.s32.totalorder %s96, %s110
      %p112 = scmp.eq.s32.totalorder %s23, 0
      %p113 = por %p111, %p112
      %s114 = ssub.s32 %s17, %s24
      %p115 = scmp.eq.s32.totalorder %s114, 0
      %s117 = sadd.s32 %s116, 1
      %s118 = scalar_select %p115, %s116, %s117
      %p121 = pneg %p115
      %p122 = scmp.eq.s32.totalorder %s17, 1
      %p123 = por %p121, %p122
      %p124 = scmp.ne.s32.totalorder %s116, %s119
      %p125 = scmp.eq.s32.totalorder %s17, 0
      %p126 = por %p124, %p125
      %p127 = scmp.ne.s32.totalorder %s116, %s119
      %p128 = scmp.eq.s32.totalorder %s22, 1
      %p129 = por %p127, %p128
      %p130 = scmp.ne.s32.totalorder %s119, %s120
      %p131 = scmp.eq.s32.totalorder %s22, 0
      %p132 = por %p130, %p131
      %p133 = scmp.ne.s32.totalorder %s119, %s120
      %p134 = scmp.eq.s32.totalorder %s23, 1
      %p135 = por %p133, %p134
      %p137 = scmp.ne.s32.totalorder %s120, %s136
      %p138 = scmp.eq.s32.totalorder %s23, 0
      %p139 = por %p137, %p138
      %p140 = scmp.le.s32.totalorder 1, %s17
      %p141 = scmp.lt.s32.totalorder %s17, 3
      %p142 = pnand %p140, %p141
      %p143 = pneg %p142
      // Predicated region
      $region9: #{tpu_custom_call.1} parent=5 // pred_check
        _
      $region10: #{tpu_custom_call.1} parent=5 // pred_check_branch
        %145 = sbr.rel (%p142) target = $region12
      $region11: #{tpu_custom_call.1} parent=5 // pred_region
        %s146 = ssub.s32 %s17, 1
        // Predicated region
        $region13: #{tpu_custom_call.1} parent=11 // pred_check
          %p147 = pneg %p64
        $region14: #{tpu_custom_call.1} parent=11 // pred_check_branch
          %149 = sbr.rel (%p147) target = $region16
        $region15: #{tpu_custom_call.1} parent=11 // pred_region
          %s151 = ssub.s32 2048, 2048
          %152 = vsyncadd [#allocation6], %s151
          %s153 = sshll.u32 [#allocation5], 4
          %s154 = int_to_ptr.vmem [resolvable:$true] %s153
          %159 = dma.hbm_to_vmem [thread:$0]  %s1, 2048, %s154, [#allocation6], 128, 128, 8
        $region16: #{tpu_custom_call.1} parent=11 // pred_fallthru
          _
        // Predicated region
        $region17: #{tpu_custom_call.1} parent=11 // pred_check
          %p160 = pneg %p85
        $region18: #{tpu_custom_call.1} parent=11 // pred_check_branch
          %162 = sbr.rel (%p160) target = $region20
        $region19: #{tpu_custom_call.1} parent=11 // pred_region
          %s164 = ssub.s32 2048, 2048
          %165 = vsyncadd [#allocation6], %s164
          %s166 = sshll.u32 [#allocation7], 4
          %s167 = int_to_ptr.vmem [resolvable:$true] %s166
          %172 = dma.hbm_to_vmem [thread:$0]  %s2, 2048, %s167, [#allocation6], 128, 128, 8
        $region20: #{tpu_custom_call.1} parent=11 // pred_fallthru
          _
        // Predicated region
        $region21: #{tpu_custom_call.1} parent=11 // pred_check
          %p173 = pneg %p106
        $region22: #{tpu_custom_call.1} parent=11 // pred_check_branch
          %175 = sbr.rel (%p173) target = $region24
        $region23: #{tpu_custom_call.1} parent=11 // pred_region
          _
        $region24: #{tpu_custom_call.1} parent=11 // pred_fallthru
          _
      $region12: #{tpu_custom_call.1} parent=5 // pred_fallthru
        _
      %p176 = scmp.lt.s32.totalorder %s17, 2
      // Predicated region
      $region25: #{tpu_custom_call.1} parent=5 // pred_check
        %p177 = pneg %p176
      $region26: #{tpu_custom_call.1} parent=5 // pred_check_branch
        %179 = sbr.rel (%p177) target = $region28
      $region27: #{tpu_custom_call.1} parent=5 // pred_region
        // Predicated region
        $region29: #{tpu_custom_call.1} parent=27 // pred_check
          %p180 = pneg %p37
        $region30: #{tpu_custom_call.1} parent=27 // pred_check_branch
          %182 = sbr.rel (%p180) target = $region32
        $region31: #{tpu_custom_call.1} parent=27 // pred_region
          %s183 = sand.u32 %s27, 1
          %s184 = scalar_lea.sflag [#allocation3], %s183
          %s185 = sand.u32 %s27, 1
          %s186 = smul.addr %s185, 16
          %s187 = scalar_lea.vmem [#allocation2], %s186
          %s188 = smul.u32 2, %s17
          %s189 = ssub.s32 3, %s188
          %p190 = scmp.lt.s32.totalorder %s189, 2
          %s191 = scalar_select %p190, %s189, 2
          %s192 = smul.u32 128, %s191
          %s194 = ssub.s32 256, %s192
          %195 = vsyncadd %s184, %s194
          %p196 = scmp.ne.s32.totalorder 0, %s192
          %s197 = smul.addr %s188, 128
          %s198 = scalar_lea.hbm %s0, %s197
          %s199 = smul.u32 8, %s191
          %s200 = sshll.u32 %s187, 4
          %s201 = int_to_ptr.vmem [resolvable:$true] %s200
          %s202 = sshll.u32 %s199, 4
          %206 = dma.hbm_to_vmem [thread:$0]  (%p196), %s198, %s202, %s201, %s184, 128, 128, 8
        $region32: #{tpu_custom_call.1} parent=27 // pred_fallthru
          _
      $region28: #{tpu_custom_call.1} parent=5 // pred_fallthru
        _
      %p207 = scmp.le.s32.totalorder 1, %s17
      %p208 = scmp.lt.s32.totalorder %s17, 3
      %p209 = pnand %p207, %p208
      %p210 = pneg %p209
      // Predicated region
      $region33: #{tpu_custom_call.1} parent=5 // pred_check
        _
      $region34: #{tpu_custom_call.1} parent=5 // pred_check_branch
        %212 = sbr.rel (%p209) target = $region36
      $region35: #{tpu_custom_call.1} parent=5 // pred_region
        %s213 = ssub.s32 %s17, 1
        %s214 = sand.u32 %s30, 1
        %s215 = scalar_lea.sflag [#allocation3], %s214
        %s216 = sand.u32 %s30, 1
        %s217 = smul.addr %s216, 16
        %s218 = scalar_lea.vmem [#allocation2], %s217
        // Predicated region
        $region37: #{tpu_custom_call.1} parent=35 // pred_check
          %p219 = pneg %p43
        $region38: #{tpu_custom_call.1} parent=35 // pred_check_branch
          %221 = sbr.rel (%p219) target = $region40
        $region39: #{tpu_custom_call.1} parent=35 // pred_region
          %222 = dma.done %s215, 256
        $region40: #{tpu_custom_call.1} parent=35 // pred_fallthru
          _
        // Predicated region
        $region41: #{tpu_custom_call.1} parent=35 // pred_check
          %p223 = pneg %p64
        $region42: #{tpu_custom_call.1} parent=35 // pred_check_branch
          %225 = sbr.rel (%p223) target = $region44
        $region43: #{tpu_custom_call.1} parent=35 // pred_region
          %226 = dma.done [#allocation6], 2048
        $region44: #{tpu_custom_call.1} parent=35 // pred_fallthru
          _
        // Predicated region
        $region45: #{tpu_custom_call.1} parent=35 // pred_check
          %p227 = pneg %p85
        $region46: #{tpu_custom_call.1} parent=35 // pred_check_branch
          %229 = sbr.rel (%p227) target = $region48
        $region47: #{tpu_custom_call.1} parent=35 // pred_region
          %230 = dma.done [#allocation6], 2048
        $region48: #{tpu_custom_call.1} parent=35 // pred_fallthru
          _
        %s231 = sand.u32 %s30, 1
        %s232 = scalar_lea.sflag [#allocation3], %s231
        %s233 = sand.u32 %s30, 1
        %s234 = smul.addr %s233, 16
        %s235 = scalar_lea.vmem [#allocation2], %s234
        %p236 = pneg %p43
        %p237 = pneg %p40
        %p238 = pneg %p64
        %p239 = pneg %p61
        %p240 = pneg %p85
        %p241 = pneg %p82
        %p242 = pneg %p106
        %p243 = pneg %p103
        %p244 = pneg %p132
        %p245 = pneg %p129
        %s246 = sand.u32 %s119, 1
        %s247 = scalar_lea.sflag [#allocation4], %s246
        %s248 = sand.u32 %s119, 1
        %s249 = smul.addr %s248, 16
        %s250 = scalar_lea.vmem [#allocation8], %s249
        %s251 = smul.u32 2, %s22
        %s252 = ssub.s32 3, %s251
        %p253 = scmp.lt.s32.totalorder %s252, 2
        %s254 = scalar_select %p253, %s252, 2
        %s255 = smul.u32 128, %s254
        %s256 = smul.u32 2, %s22
        %s257 = ssub.s32 3, %s256
        %p258 = scmp.lt.s32.totalorder %s257, 2
        %s259 = scalar_select %p258, %s257, 2
        %s260 = smul.u32 128, %s259
        %v261 = vld [vmem:[%s218] sm:$0xff]
        %v262 = vld [vmem:[%s218 + $0x8] sm:$0xff]
        %v263 = vld [vmem:[#allocation5] sm:$0xff]
        %v264 = vld [vmem:[#allocation5 + $0x8] sm:$0xff]
        %v265 = vld [vmem:[#allocation5 + $0x10] sm:$0xff]
        %v266 = vld [vmem:[#allocation5 + $0x18] sm:$0xff]
        %v267 = vld [vmem:[#allocation5 + $0x20] sm:$0xff]
        %v268 = vld [vmem:[#allocation5 + $0x28] sm:$0xff]
        %v269 = vld [vmem:[#allocation5 + $0x30] sm:$0xff]
        %v270 = vld [vmem:[#allocation5 + $0x38] sm:$0xff]
        %v271 = vld [vmem:[#allocation5 + $0x40] sm:$0xff]
        %v272 = vld [vmem:[#allocation5 + $0x48] sm:$0xff]
        %v273 = vld [vmem:[#allocation5 + $0x50] sm:$0xff]
        %v274 = vld [vmem:[#allocation5 + $0x58] sm:$0xff]
        %v275 = vld [vmem:[#allocation5 + $0x60] sm:$0xff]
        %v276 = vld [vmem:[#allocation5 + $0x68] sm:$0xff]
        %v277 = vld [vmem:[#allocation5 + $0x70] sm:$0xff]
        %v278 = vld [vmem:[#allocation5 + $0x78] sm:$0xff]
        %v279 = vld [vmem:[%s3] sm:$0x1]
        %v280 = vlaneseq
        %v281 = vshrl.u32 %v280, 7
        %v282 = vsub.s32 0, %v281
        %v283 = vrot.slane %v279, %v282
        %284 = vmatprep.subr.mxu0 0.0
        %285 = vmatpush1.msra.mxu0 %v263
        %286 = vmatprep.subr.mxu0 0.0
        %287 = vmatpush1.msra.mxu0 %v264
        %288 = vmatprep.subr.mxu0 0.0
        %289 = vmatpush1.msra.mxu0 %v265
        %290 = vmatprep.subr.mxu0 0.0
        %291 = vmatpush1.msra.mxu0 %v266
        %292 = vmatprep.subr.mxu0 0.0
        %293 = vmatpush1.msra.mxu0 %v267
        %294 = vmatprep.subr.mxu0 0.0
        %295 = vmatpush1.msra.mxu0 %v268
        %296 = vmatprep.subr.mxu0 0.0
        %297 = vmatpush1.msra.mxu0 %v269
        %298 = vmatprep.subr.mxu0 0.0
        %299 = vmatpush1.msra.mxu0 %v270
        %300 = vmatprep.subr.mxu0 0.0
        %301 = vmatpush1.msra.mxu0 %v271
        %302 = vmatprep.subr.mxu0 0.0
        %303 = vmatpush1.msra.mxu0 %v272
        %304 = vmatprep.subr.mxu0 0.0
        %305 = vmatpush1.msra.mxu0 %v273
        %306 = vmatprep.subr.mxu0 0.0
        %307 = vmatpush1.msra.mxu0 %v274
        %308 = vmatprep.subr.mxu0 0.0
        %309 = vmatpush1.msra.mxu0 %v275
        %310 = vmatprep.subr.mxu0 0.0
        %311 = vmatpush1.msra.mxu0 %v276
        %312 = vmatprep.subr.mxu0 0.0
        %313 = vmatpush1.msra.mxu0 %v277
        %314 = vmatprep.subr.mxu0 0.0
        %315 = vmatpush1.msra.mxu0 %v278
        %316 = vmatprep.subr.mxu0 0.0
        %317 = vmatpush1.msra.mxu0 0.0
        %318 = vmatprep.subr.mxu0 0.0
        %319 = vmatpush1.msra.mxu0 0.0
        %320 = vmatprep.subr.mxu0 0.0
        %321 = vmatpush1.msra.mxu0 0.0
        %322 = vmatprep.subr.mxu0 0.0
        %323 = vmatpush1.msra.mxu0 0.0
        %324 = vmatprep.subr.mxu0 0.0
        %325 = vmatpush1.msra.mxu0 0.0
        %326 = vmatprep.subr.mxu0 0.0
        %327 = vmatpush1.msra.mxu0 0.0
        %328 = vmatprep.subr.mxu0 0.0
        %329 = vmatpush1.msra.mxu0 0.0
        %330 = vmatprep.subr.mxu0 0.0
        %331 = vmatpush1.msra.mxu0 0.0
        %332 = vmatprep.subr.mxu0 0.0
        %333 = vmatpush1.msra.mxu0 0.0
        %334 = vmatprep.subr.mxu0 0.0
        %335 = vmatpush1.msra.mxu0 0.0
        %336 = vmatprep.subr.mxu0 0.0
        %337 = vmatpush1.msra.mxu0 0.0
        %338 = vmatprep.subr.mxu0 0.0
        %339 = vmatpush1.msra.mxu0 0.0
        %340 = vmatprep.subr.mxu0 0.0
        %341 = vmatpush1.msra.mxu0 0.0
        %342 = vmatprep.subr.mxu0 0.0
        %343 = vmatpush1.msra.mxu0 0.0
        %344 = vmatprep.subr.mxu0 0.0
        %345 = vmatpush1.msra.mxu0 0.0
        %346 = vmatprep.subr.mxu0 0.0
        %347 = vmatpush1.msra.mxu0 0.0
        %348 = vmatprep.mubr.f32.mxu0 0.0
        %349 = vmatmul.mubr.f32.gmra.mrb[0].mxu0 %v261
        %v350 = vpop.f32.mrb[0].mxu0
        %v351 = vadd.f32 %v283, %v350
        %v352 = vpop.f32.mrb[0].mxu0
        %353 = vmatprep.mubr.f32.mxu0 0.0
        %354 = vmatmul.mubr.f32.gmra.mrb[0].mxu0 %v262
        %v355 = vpop.f32.mrb[0].mxu0
        %v356 = vadd.f32 %v283, %v355
        %v357 = vpop.f32.mrb[0].mxu0
        %358 = vdwg.mxu0
        %359 = vadd.xlane.f32.xlu0 %v351
        %v360 = vpop.xlane.xlu0 %359
        %361 = vadd.xlane.f32.xlu0 %v356
        %v362 = vpop.xlane.xlu0 %361
        %v363 = vrcp.pop 128.0
        %v364 = vmul.f32 %v360, %v363
        %v365 = vmul.f32 %v362, %v363
        %v366 = vsub.f32 %v351, %v364
        %v367 = vsub.f32 %v356, %v365
        %v368 = vmul.f32 %v366, %v366
        %v369 = vmul.f32 %v367, %v367
        %370 = vadd.xlane.f32.xlu0 %v368
        %v371 = vpop.xlane.xlu0 %370
        %372 = vadd.xlane.f32.xlu0 %v369
        %v373 = vpop.xlane.xlu0 %372
        %v374 = vmul.f32 %v371, %v363
        %v375 = vmul.f32 %v373, %v363
        %v376 = vadd.f32 %v374, 1e-05
        %v377 = vadd.f32 %v375, 1e-05
        %v378 = vrsqrt.pop %v376
        %v379 = vrsqrt.pop %v377
        %v380 = vld [vmem:[%s3 + $0x1] sm:$0x1]
        %v381 = vlaneseq
        %v382 = vshrl.u32 %v381, 7
        %v383 = vsub.s32 0, %v382
        %v384 = vrot.slane %v380, %v383
        %v385 = vmul.f32 %v378, %v384
        %v386 = vmul.f32 %v379, %v384
        %v387 = vmul.f32 %v366, %v385
        %v388 = vmul.f32 %v367, %v386
        %v389 = vld [vmem:[%s3 + $0x2] sm:$0x1]
        %v390 = vlaneseq
        %v391 = vshrl.u32 %v390, 7
        %v392 = vsub.s32 0, %v391
        %v393 = vrot.slane %v389, %v392
        %v394 = vadd.f32 %v387, %v393
        %v395 = vadd.f32 %v388, %v393
        %v396 = vmul.f32 %v394, 0.5
        %v397 = vmul.f32 %v395, 0.5
        %v398 = vmul.f32 %v394, 0.70710677
        %v399 = vmul.f32 %v395, 0.70710677
        %v400 = verf.f32.pop %v398
        %v401 = verf.f32.pop %v399
        %v402 = vadd.f32 %v400, 1.0
        %v403 = vadd.f32 %v401, 1.0
        %v404 = vmul.f32 %v396, %v402
        %v405 = vmul.f32 %v397, %v403
        %v406 = vld [vmem:[#allocation7] sm:$0xff]
        %v407 = vld [vmem:[#allocation7 + $0x8] sm:$0xff]
        %v408 = vld [vmem:[#allocation7 + $0x10] sm:$0xff]
        %v409 = vld [vmem:[#allocation7 + $0x18] sm:$0xff]
        %v410 = vld [vmem:[#allocation7 + $0x20] sm:$0xff]
        %v411 = vld [vmem:[#allocation7 + $0x28] sm:$0xff]
        %v412 = vld [vmem:[#allocation7 + $0x30] sm:$0xff]
        %v413 = vld [vmem:[#allocation7 + $0x38] sm:$0xff]
        %v414 = vld [vmem:[#allocation7 + $0x40] sm:$0xff]
        %v415 = vld [vmem:[#allocation7 + $0x48] sm:$0xff]
        %v416 = vld [vmem:[#allocation7 + $0x50] sm:$0xff]
        %v417 = vld [vmem:[#allocation7 + $0x58] sm:$0xff]
        %v418 = vld [vmem:[#allocation7 + $0x60] sm:$0xff]
        %v419 = vld [vmem:[#allocation7 + $0x68] sm:$0xff]
        %v420 = vld [vmem:[#allocation7 + $0x70] sm:$0xff]
        %v421 = vld [vmem:[#allocation7 + $0x78] sm:$0xff]
        %v422 = vld [vmem:[%s3 + $0x3] sm:$0x1]
        %v423 = vlaneseq
        %v424 = vshrl.u32 %v423, 7
        %v425 = vsub.s32 0, %v424
        %v426 = vrot.slane %v422, %v425
        %427 = vmatprep.subr.mxu0 0.0
        %428 = vmatpush1.msra.mxu0 %v406
        %429 = vmatprep.subr.mxu0 0.0
        %430 = vmatpush1.msra.mxu0 %v407
        %431 = vmatprep.subr.mxu0 0.0
        %432 = vmatpush1.msra.mxu0 %v408
        %433 = vmatprep.subr.mxu0 0.0
        %434 = vmatpush1.msra.mxu0 %v409
        %435 = vmatprep.subr.mxu0 0.0
        %436 = vmatpush1.msra.mxu0 %v410
        %437 = vmatprep.subr.mxu0 0.0
        %438 = vmatpush1.msra.mxu0 %v411
        %439 = vmatprep.subr.mxu0 0.0
        %440 = vmatpush1.msra.mxu0 %v412
        %441 = vmatprep.subr.mxu0 0.0
        %442 = vmatpush1.msra.mxu0 %v413
        %443 = vmatprep.subr.mxu0 0.0
        %444 = vmatpush1.msra.mxu0 %v414
        %445 = vmatprep.subr.mxu0 0.0
        %446 = vmatpush1.msra.mxu0 %v415
        %447 = vmatprep.subr.mxu0 0.0
        %448 = vmatpush1.msra.mxu0 %v416
        %449 = vmatprep.subr.mxu0 0.0
        %450 = vmatpush1.msra.mxu0 %v417
        %451 = vmatprep.subr.mxu0 0.0
        %452 = vmatpush1.msra.mxu0 %v418
        %453 = vmatprep.subr.mxu0 0.0
        %454 = vmatpush1.msra.mxu0 %v419
        %455 = vmatprep.subr.mxu0 0.0
        %456 = vmatpush1.msra.mxu0 %v420
        %457 = vmatprep.subr.mxu0 0.0
        %458 = vmatpush1.msra.mxu0 %v421
        %459 = vmatprep.subr.mxu0 0.0
        %460 = vmatpush1.msra.mxu0 0.0
        %461 = vmatprep.subr.mxu0 0.0
        %462 = vmatpush1.msra.mxu0 0.0
        %463 = vmatprep.subr.mxu0 0.0
        %464 = vmatpush1.msra.mxu0 0.0
        %465 = vmatprep.subr.mxu0 0.0
        %466 = vmatpush1.msra.mxu0 0.0
        %467 = vmatprep.subr.mxu0 0.0
        %468 = vmatpush1.msra.mxu0 0.0
        %469 = vmatprep.subr.mxu0 0.0
        %470 = vmatpush1.msra.mxu0 0.0
        %471 = vmatprep.subr.mxu0 0.0
        %472 = vmatpush1.msra.mxu0 0.0
        %473 = vmatprep.subr.mxu0 0.0
        %474 = vmatpush1.msra.mxu0 0.0
        %475 = vmatprep.subr.mxu0 0.0
        %476 = vmatpush1.msra.mxu0 0.0
        %477 = vmatprep.subr.mxu0 0.0
        %478 = vmatpush1.msra.mxu0 0.0
        %479 = vmatprep.subr.mxu0 0.0
        %480 = vmatpush1.msra.mxu0 0.0
        %481 = vmatprep.subr.mxu0 0.0
        %482 = vmatpush1.msra.mxu0 0.0
        %483 = vmatprep.subr.mxu0 0.0
        %484 = vmatpush1.msra.mxu0 0.0
        %485 = vmatprep.subr.mxu0 0.0
        %486 = vmatpush1.msra.mxu0 0.0
        %487 = vmatprep.subr.mxu0 0.0
        %488 = vmatpush1.msra.mxu0 0.0
        %489 = vmatprep.subr.mxu0 0.0
        %490 = vmatpush1.msra.mxu0 0.0
        %491 = vmatprep.mubr.f32.mxu0 0.0
        %492 = vmatmul.mubr.f32.gmra.mrb[0].mxu0 %v404
        %v493 = vpop.f32.mrb[0].mxu0
        %v494 = vadd.f32 %v426, %v493
        %v495 = vpop.f32.mrb[0].mxu0
        %496 = vmatprep.mubr.f32.mxu0 0.0
        %497 = vmatmul.mubr.f32.gmra.mrb[0].mxu0 %v405
        %v498 = vpop.f32.mrb[0].mxu0
        %v499 = vadd.f32 %v426, %v498
        %v500 = vpop.f32.mrb[0].mxu0
        %501 = vdwg.mxu0
        %502 = vadd.xlane.f32.xlu0 %v494
        %v503 = vpop.xlane.xlu0 %502
        %504 = vadd.xlane.f32.xlu0 %v499
        %v505 = vpop.xlane.xlu0 %504
        %v506 = vmul.f32 %v503, %v363
        %v507 = vmul.f32 %v505, %v363
        %v508 = vsub.f32 %v494, %v506
        %v509 = vsub.f32 %v499, %v507
        %v510 = vmul.f32 %v508, %v508
        %v511 = vmul.f32 %v509, %v509
        %512 = vadd.xlane.f32.xlu0 %v510
        %v513 = vpop.xlane.xlu0 %512
        %514 = vadd.xlane.f32.xlu0 %v511
        %v515 = vpop.xlane.xlu0 %514
        %v516 = vmul.f32 %v513, %v363
        %v517 = vmul.f32 %v515, %v363
        %v518 = vadd.f32 %v516, 1e-05
        %v519 = vadd.f32 %v517, 1e-05
        %v520 = vrsqrt.pop %v518
        %v521 = vrsqrt.pop %v519
        %v522 = vld [vmem:[%s3 + $0x4] sm:$0x1]
        %v523 = vlaneseq
        %v524 = vshrl.u32 %v523, 7
        %v525 = vsub.s32 0, %v524
        %v526 = vrot.slane %v522, %v525
        %v527 = vmul.f32 %v520, %v526
        %v528 = vmul.f32 %v521, %v526
        %v529 = vmul.f32 %v508, %v527
        %v530 = vmul.f32 %v509, %v528
        %v531 = vld [vmem:[%s3 + $0x5] sm:$0x1]
        %v532 = vlaneseq
        %v533 = vshrl.u32 %v532, 7
        %v534 = vsub.s32 0, %v533
        %v535 = vrot.slane %v531, %v534
        %v536 = vadd.f32 %v529, %v535
        %v537 = vadd.f32 %v530, %v535
        %v538 = vadd.f32 %v261, %v536
        %v539 = vadd.f32 %v262, %v537
        %540 = vst [vmem:[%s250] sm:$0xff] %v538
        %541 = vst [vmem:[%s250 + $0x8] sm:$0xff] %v539
        %s542 = sand.u32 %s119, 1
        %s543 = scalar_lea.sflag [#allocation4], %s542
        %s544 = sand.u32 %s119, 1
        %s545 = smul.addr %s544, 16
        %s546 = scalar_lea.vmem [#allocation8], %s545
        // Predicated region
        $region49: #{tpu_custom_call.1} parent=35 // pred_check
          %p547 = pneg %p129
        $region50: #{tpu_custom_call.1} parent=35 // pred_check_branch
          %549 = sbr.rel (%p547) target = $region52
        $region51: #{tpu_custom_call.1} parent=35 // pred_region
          %s550 = smul.u32 2, %s22
          %s551 = ssub.s32 3, %s550
          %p552 = scmp.lt.s32.totalorder %s551, 2
          %s553 = scalar_select %p552, %s551, 2
          %s554 = smul.u32 128, %s553
          %s556 = ssub.s32 256, %s554
          %557 = vsyncadd %s543, %s556
          %p558 = scmp.ne.s32.totalorder 0, %s554
          %s559 = smul.addr %s550, 128
          %s560 = scalar_lea.hbm %s4, %s559
          %s561 = smul.u32 8, %s553
          %s562 = sshll.u32 %s546, 4
          %s563 = int_to_ptr.vmem [resolvable:$true] %s562
          %s564 = sshll.u32 %s561, 4
          %568 = dma.vmem_to_hbm [thread:$0]  (%p558), %s563, %s564, %s560, %s543, 128, 128, 8
        $region52: #{tpu_custom_call.1} parent=35 // pred_fallthru
          _
      $region36: #{tpu_custom_call.1} parent=5 // pred_fallthru
        _
      %p569 = scmp.le.s32.totalorder 2, %s17
      // Predicated region
      $region53: #{tpu_custom_call.1} parent=5 // pred_check
        %p570 = pneg %p569
      $region54: #{tpu_custom_call.1} parent=5 // pred_check_branch
        %572 = sbr.rel (%p570) target = $region56
      $region55: #{tpu_custom_call.1} parent=5 // pred_region
        %s573 = ssub.s32 %s17, 2
        // Predicated region
        $region57: #{tpu_custom_call.1} parent=55 // pred_check
          %p574 = pneg %p135
        $region58: #{tpu_custom_call.1} parent=55 // pred_check_branch
          %576 = sbr.rel (%p574) target = $region60
        $region59: #{tpu_custom_call.1} parent=55 // pred_region
          %s577 = sand.u32 %s120, 1
          %s578 = scalar_lea.sflag [#allocation4], %s577
          %s579 = sand.u32 %s120, 1
          %s580 = smul.addr %s579, 16
          %s581 = scalar_lea.vmem [#allocation8], %s580
          %582 = dma.done %s578, 256
        $region60: #{tpu_custom_call.1} parent=55 // pred_fallthru
          _
      $region56: #{tpu_custom_call.1} parent=5 // pred_fallthru
        _
    $region6: #{tpu_custom_call.1} parent=1 // loop_footer
      %s21 = sadd.s32 1, %s17
    $region7: #{tpu_custom_call.1} parent=1 // loop_footer_branch
      %16 = sbr.rel target = $region3
    $region8: #{tpu_custom_call.1} parent=1 // loop_exit
      _
    %583 = vsyncpa [#allocation3], 1
    %s584 = scalar_lea.sflag [#allocation3], 1
    %585 = vsyncpa %s584, 1
    %586 = vsyncpa [#allocation6], 1
    %587 = vsyncpa [#allocation4], 1
    %s588 = scalar_lea.sflag [#allocation4], 1
    %589 = vsyncpa %s588, 1

// kernel: tpu_custom_call.1
$region0: #{tpu_custom_call.1}
  #allocation0 [shape = 'u32[]', space=smem, size = 0x4, offset = 0x4, fixed_abs, tag = 'smem constant byte address 0x4 - core index']
  #allocation1 [shape = 'u32[144,128]{1,0:T(1,128)}', space=vmem, size = 0x12000, scoped, tag = 'internal scratch']
  %s0 = inlined_call_operand.hbm [shape: f32[20,128], index: 0, kind: input, shape index: {}]
  %s1 = inlined_call_operand.hbm [shape: f32[128,128], index: 1, kind: input, shape index: {}]
  %s2 = inlined_call_operand.hbm [shape: f32[128,128], index: 2, kind: input, shape index: {}]
  %s3 = inlined_call_operand.vmem [shape: f32[8,128], index: 3, kind: input, shape index: {}]
  %s4 = inlined_call_operand.hbm [shape: f32[20,128], index: 4, kind: output, shape index: {}]
  %s5 = sld [smem:[#allocation0]]
  $region61: #{tpu_custom_call.1} parent=0
    _
  %s7 = ssub.s32 1, %s5
  %s8 = scalar_select 0, %s7, %s5
  $region1: #{tpu_custom_call.1} parent=0
    #allocation2 [shape = 'u8[16384]{0}', space=vmem, size = 0x4000, scoped, tag = 'input window, operand 0']
    #allocation3 [shape = 's32[2]{0}', space=sflag, size = 0x8, scoped, tag = 'scoped memory for tpu_custom_call.1']
    #allocation4 [shape = 's32[2]{0}', space=sflag, size = 0x8, scoped, tag = 'scoped memory for tpu_custom_call.1']
    #allocation5 [shape = 'u8[65536]{0}', space=vmem, size = 0x10000, scoped, tag = 'input window, operand 1, single buffered']
    #allocation6 [shape = 's32[1]{0}', space=sflag, size = 0x4, scoped, tag = 'scoped memory for tpu_custom_call.1']
    #allocation7 [shape = 'u8[65536]{0}', space=vmem, size = 0x10000, scoped, tag = 'input window, operand 2, single buffered']
    #allocation8 [shape = 'u8[16384]{0}', space=vmem, size = 0x4000, scoped, tag = 'output window, operand 0']
    %9 = vsyncpa [#allocation3], 0
    %s10 = scalar_lea.sflag [#allocation3], 1
    %11 = vsyncpa %s10, 0
    %12 = vsyncpa [#allocation6], 0
    %13 = vsyncpa [#allocation4], 0
    %s14 = scalar_lea.sflag [#allocation4], 1
    %15 = vsyncpa %s14, 0
    loop: start=0, step=1, limit=4
    $region2: #{tpu_custom_call.1} parent=1 // loop_pre_header
      _
    $region3: #{tpu_custom_call.1} parent=1 // loop_header
      %s17 = sphi 0, %s21
      %p18 = scmp.ge.s32.totalorder %s17, 4
      %s27 = sphi 0, %s29
      %s30 = sphi 0, %s27
      %s31 = sphi 0, %s30
      %s47 = sphi 0, %s31
      %s51 = sphi 0, %s51
      %s53 = sphi 0, %s51
      %s54 = sphi 0, %s53
      %s68 = sphi 0, %s54
      %s72 = sphi 0, %s72
      %s74 = sphi 0, %s72
      %s75 = sphi 0, %s74
      %s89 = sphi 0, %s75
      %s93 = sphi 0, %s93
      %s95 = sphi 0, %s93
      %s96 = sphi 0, %s95
      %s110 = sphi 0, %s96
      %s116 = sphi 0, %s118
      %s119 = sphi 0, %s116
      %s120 = sphi 0, %s119
      %s136 = sphi 0, %s120
    $region4: #{tpu_custom_call.1} parent=1 // loop_header_branch
      %20 = sbr.rel (%p18) target = $region8
    $region5: #{tpu_custom_call.1} parent=1 // loop_body
      %s22 = ssub.s32 %s17, 1
      %s23 = ssub.s32 %s17, 2
      %s24 = sadd.s32 %s17, 1
      %s25 = ssub.s32 %s17, %s24
      %p26 = scmp.eq.s32.totalorder %s25, 0
      %s28 = sadd.s32 %s27, 1
      %s29 = scalar_select %p26, %s27, %s28
      %p32 = pneg %p26
      %p33 = scmp.eq.s32.totalorder %s17, 1
      %p34 = por %p32, %p33
      %p35 = scmp.ne.s32.totalorder %s27, %s30
      %p36 = scmp.eq.s32.totalorder %s17, 0
      %p37 = por %p35, %p36
      %p38 = scmp.ne.s32.totalorder %s27, %s30
      %p39 = scmp.eq.s32.totalorder %s22, 1
      %p40 = por %p38, %p39
      %p41 = scmp.ne.s32.totalorder %s30, %s31
      %p42 = scmp.eq.s32.totalorder %s22, 0
      %p43 = por %p41, %p42
      %p44 = scmp.ne.s32.totalorder %s30, %s31
      %p45 = scmp.eq.s32.totalorder %s23, 1
      %p46 = por %p44, %p45
      %p48 = scmp.ne.s32.totalorder %s31, %s47
      %p49 = scmp.eq.s32.totalorder %s23, 0
      %p50 = por %p48, %p49
      %s52 = sadd.s32 %s51, 1
      %p55 = scmp.eq.s32.totalorder %s17, 1
      %p56 = scmp.ne.s32.totalorder %s51, %s53
      %p57 = scmp.eq.s32.totalorder %s17, 0
      %p58 = por %p56, %p57
      %p59 = scmp.ne.s32.totalorder %s51, %s53
      %p60 = scmp.eq.s32.totalorder %s22, 1
      %p61 = por %p59, %p60
      %p62 = scmp.ne.s32.totalorder %s53, %s54
      %p63 = scmp.eq.s32.totalorder %s22, 0
      %p64 = por %p62, %p63
      %p65 = scmp.ne.s32.totalorder %s53, %s54
      %p66 = scmp.eq.s32.totalorder %s23, 1
      %p67 = por %p65, %p66
      %p69 = scmp.ne.s32.totalorder %s54, %s68
      %p70 = scmp.eq.s32.totalorder %s23, 0
      %p71 = por %p69, %p70
      %s73 = sadd.s32 %s72, 1
      %p76 = scmp.eq.s32.totalorder %s17, 1
      %p77 = scmp.ne.s32.totalorder %s72, %s74
      %p78 = scmp.eq.s32.totalorder %s17, 0
      %p79 = por %p77, %p78
      %p80 = scmp.ne.s32.totalorder %s72, %s74
      %p81 = scmp.eq.s32.totalorder %s22, 1
      %p82 = por %p80, %p81
      %p83 = scmp.ne.s32.totalorder %s74, %s75
      %p84 = scmp.eq.s32.totalorder %s22, 0
      %p85 = por %p83, %p84
      %p86 = scmp.ne.s32.totalorder %s74, %s75
      %p87 = scmp.eq.s32.totalorder %s23, 1
      %p88 = por %p86, %p87
      %p90 = scmp.ne.s32.totalorder %s75, %s89
      %p91 = scmp.eq.s32.totalorder %s23, 0
      %p92 = por %p90, %p91
      %s94 = sadd.s32 %s93, 1
      %p97 = scmp.eq.s32.totalorder %s17, 1
      %p98 = scmp.ne.s32.totalorder %s93, %s95
      %p99 = scmp.eq.s32.totalorder %s17, 0
      %p100 = por %p98, %p99
      %p101 = scmp.ne.s32.totalorder %s93, %s95
      %p102 = scmp.eq.s32.totalorder %s22, 1
      %p103 = por %p101, %p102
      %p104 = scmp.ne.s32.totalorder %s95, %s96
      %p105 = scmp.eq.s32.totalorder %s22, 0
      %p106 = por %p104, %p105
      %p107 = scmp.ne.s32.totalorder %s95, %s96
      %p108 = scmp.eq.s32.totalorder %s23, 1
      %p109 = por %p107, %p108
      %p111 = scmp.ne.s32.totalorder %s96, %s110
      %p112 = scmp.eq.s32.totalorder %s23, 0
      %p113 = por %p111, %p112
      %s114 = ssub.s32 %s17, %s24
      %p115 = scmp.eq.s32.totalorder %s114, 0
      %s117 = sadd.s32 %s116, 1
      %s118 = scalar_select %p115, %s116, %s117
      %p121 = pneg %p115
      %p122 = scmp.eq.s32.totalorder %s17, 1
      %p123 = por %p121, %p122
      %p124 = scmp.ne.s32.totalorder %s116, %s119
      %p125 = scmp.eq.s32.totalorder %s17, 0
      %p126 = por %p124, %p125
      %p127 = scmp.ne.s32.totalorder %s116, %s119
      %p128 = scmp.eq.s32.totalorder %s22, 1
      %p129 = por %p127, %p128
      %p130 = scmp.ne.s32.totalorder %s119, %s120
      %p131 = scmp.eq.s32.totalorder %s22, 0
      %p132 = por %p130, %p131
      %p133 = scmp.ne.s32.totalorder %s119, %s120
      %p134 = scmp.eq.s32.totalorder %s23, 1
      %p135 = por %p133, %p134
      %p137 = scmp.ne.s32.totalorder %s120, %s136
      %p138 = scmp.eq.s32.totalorder %s23, 0
      %p139 = por %p137, %p138
      %p140 = scmp.le.s32.totalorder 1, %s17
      %p141 = scmp.lt.s32.totalorder %s17, 3
      %p142 = pnand %p140, %p141
      %p143 = pneg %p142
      // Predicated region
      $region9: #{tpu_custom_call.1} parent=5 // pred_check
        _
      $region10: #{tpu_custom_call.1} parent=5 // pred_check_branch
        %145 = sbr.rel (%p142) target = $region12
      $region11: #{tpu_custom_call.1} parent=5 // pred_region
        %s146 = ssub.s32 %s17, 1
        // Predicated region
        $region13: #{tpu_custom_call.1} parent=11 // pred_check
          %p147 = pneg %p64
        $region14: #{tpu_custom_call.1} parent=11 // pred_check_branch
          %149 = sbr.rel (%p147) target = $region16
        $region15: #{tpu_custom_call.1} parent=11 // pred_region
          %s151 = ssub.s32 2048, 2048
          %152 = vsyncadd [#allocation6], %s151
          %s153 = sshll.u32 [#allocation5], 4
          %s154 = int_to_ptr.vmem [resolvable:$true] %s153
          %159 = dma.hbm_to_vmem [thread:$0]  %s1, 2048, %s154, [#allocation6], 128, 128, 8
        $region16: #{tpu_custom_call.1} parent=11 // pred_fallthru
          _
        // Predicated region
        $region17: #{tpu_custom_call.1} parent=11 // pred_check
          %p160 = pneg %p85
        $region18: #{tpu_custom_call.1} parent=11 // pred_check_branch
          %162 = sbr.rel (%p160) target = $region20
        $region19: #{tpu_custom_call.1} parent=11 // pred_region
          %s164 = ssub.s32 2048, 2048
          %165 = vsyncadd [#allocation6], %s164
          %s166 = sshll.u32 [#allocation7], 4
          %s167 = int_to_ptr.vmem [resolvable:$true] %s166
          %172 = dma.hbm_to_vmem [thread:$0]  %s2, 2048, %s167, [#allocation6], 128, 128, 8
        $region20: #{tpu_custom_call.1} parent=11 // pred_fallthru
          _
        // Predicated region
        $region21: #{tpu_custom_call.1} parent=11 // pred_check
          %p173 = pneg %p106
        $region22: #{tpu_custom_call.1} parent=11 // pred_check_branch
          %175 = sbr.rel (%p173) target = $region24
        $region23: #{tpu_custom_call.1} parent=11 // pred_region
          _
        $region24: #{tpu_custom_call.1} parent=11 // pred_fallthru
          _
      $region12: #{tpu_custom_call.1} parent=5 // pred_fallthru
        _
      %p176 = scmp.lt.s32.totalorder %s17, 2
      // Predicated region
      $region25: #{tpu_custom_call.1} parent=5 // pred_check
        %p177 = pneg %p176
      $region26: #{tpu_custom_call.1} parent=5 // pred_check_branch
        %179 = sbr.rel (%p177) target = $region28
      $region27: #{tpu_custom_call.1} parent=5 // pred_region
        // Predicated region
        $region29: #{tpu_custom_call.1} parent=27 // pred_check
          %p180 = pneg %p37
        $region30: #{tpu_custom_call.1} parent=27 // pred_check_branch
          %182 = sbr.rel (%p180) target = $region32
        $region31: #{tpu_custom_call.1} parent=27 // pred_region
          %s183 = sand.u32 %s27, 1
          %s184 = scalar_lea.sflag [#allocation3], %s183
          %s185 = sand.u32 %s27, 1
          %s186 = smul.addr %s185, 16
          %s187 = scalar_lea.vmem [#allocation2], %s186
          %s188 = smul.u32 2, %s17
          %s189 = ssub.s32 3, %s188
          %p190 = scmp.lt.s32.totalorder %s189, 2
          %s191 = scalar_select %p190, %s189, 2
          %s192 = smul.u32 128, %s191
          %s194 = ssub.s32 256, %s192
          %195 = vsyncadd %s184, %s194
          %p196 = scmp.ne.s32.totalorder 0, %s192
          %s197 = smul.addr %s188, 128
          %s198 = scalar_lea.hbm %s0, %s197
          %s199 = smul.u32 8, %s191
          %s200 = sshll.u32 %s187, 4
          %s201 = int_to_ptr.vmem [resolvable:$true] %s200
          %s202 = sshll.u32 %s199, 4
          %206 = dma.hbm_to_vmem [thread:$0]  (%p196), %s198, %s202, %s201, %s184, 128, 128, 8
        $region32: #{tpu_custom_call.1} parent=27 // pred_fallthru
          _
      $region28: #{tpu_custom_call.1} parent=5 // pred_fallthru
        _
      %p207 = scmp.le.s32.totalorder 1, %s17
      %p208 = scmp.lt.s32.totalorder %s17, 3
      %p209 = pnand %p207, %p208
      %p210 = pneg %p209
      // Predicated region
      $region33: #{tpu_custom_call.1} parent=5 // pred_check
        _
      $region34: #{tpu_custom_call.1} parent=5 // pred_check_branch
        %212 = sbr.rel (%p209) target = $region36
      $region35: #{tpu_custom_call.1} parent=5 // pred_region
        %s213 = ssub.s32 %s17, 1
        %s214 = sand.u32 %s30, 1
        %s215 = scalar_lea.sflag [#allocation3], %s214
        %s216 = sand.u32 %s30, 1
        %s217 = smul.addr %s216, 16
        %s218 = scalar_lea.vmem [#allocation2], %s217
        // Predicated region
        $region37: #{tpu_custom_call.1} parent=35 // pred_check
          %p219 = pneg %p43
        $region38: #{tpu_custom_call.1} parent=35 // pred_check_branch
          %221 = sbr.rel (%p219) target = $region40
        $region39: #{tpu_custom_call.1} parent=35 // pred_region
          %222 = dma.done %s215, 256
        $region40: #{tpu_custom_call.1} parent=35 // pred_fallthru
          _
        // Predicated region
        $region41: #{tpu_custom_call.1} parent=35 // pred_check
          %p223 = pneg %p64
        $region42: #{tpu_custom_call.1} parent=35 // pred_check_branch
          %225 = sbr.rel (%p223) target = $region44
        $region43: #{tpu_custom_call.1} parent=35 // pred_region
          %226 = dma.done [#allocation6], 2048
        $region44: #{tpu_custom_call.1} parent=35 // pred_fallthru
          _
        // Predicated region
        $region45: #{tpu_custom_call.1} parent=35 // pred_check
          %p227 = pneg %p85
        $region46: #{tpu_custom_call.1} parent=35 // pred_check_branch
          %229 = sbr.rel (%p227) target = $region48
        $region47: #{tpu_custom_call.1} parent=35 // pred_region
          %230 = dma.done [#allocation6], 2048
        $region48: #{tpu_custom_call.1} parent=35 // pred_fallthru
          _
        %s231 = sand.u32 %s30, 1
        %s232 = scalar_lea.sflag [#allocation3], %s231
        %s233 = sand.u32 %s30, 1
        %s234 = smul.addr %s233, 16
        %s235 = scalar_lea.vmem [#allocation2], %s234
        %p236 = pneg %p43
        %p237 = pneg %p40
        %p238 = pneg %p64
        %p239 = pneg %p61
        %p240 = pneg %p85
        %p241 = pneg %p82
        %p242 = pneg %p106
        %p243 = pneg %p103
        %p244 = pneg %p132
        %p245 = pneg %p129
        %s246 = sand.u32 %s119, 1
        %s247 = scalar_lea.sflag [#allocation4], %s246
        %s248 = sand.u32 %s119, 1
        %s249 = smul.addr %s248, 16
        %s250 = scalar_lea.vmem [#allocation8], %s249
        %s251 = smul.u32 2, %s22
        %s252 = ssub.s32 3, %s251
        %p253 = scmp.lt.s32.totalorder %s252, 2
        %s254 = scalar_select %p253, %s252, 2
        %s255 = smul.u32 128, %s254
        %s256 = smul.u32 2, %s22
        %s257 = ssub.s32 3, %s256
        %p258 = scmp.lt.s32.totalorder %s257, 2
        %s259 = scalar_select %p258, %s257, 2
        %s260 = smul.u32 128, %s259
        %v261 = vld [vmem:[%s218] sm:$0xff]
        %v262 = vld [vmem:[%s218 + $0x8] sm:$0xff]
        %v263 = vld [vmem:[#allocation5] sm:$0xff]
        %v264 = vld [vmem:[#allocation5 + $0x8] sm:$0xff]
        %v265 = vld [vmem:[#allocation5 + $0x10] sm:$0xff]
        %v266 = vld [vmem:[#allocation5 + $0x18] sm:$0xff]
        %v267 = vld [vmem:[#allocation5 + $0x20] sm:$0xff]
        %v268 = vld [vmem:[#allocation5 + $0x28] sm:$0xff]
        %v269 = vld [vmem:[#allocation5 + $0x30] sm:$0xff]
        %v270 = vld [vmem:[#allocation5 + $0x38] sm:$0xff]
        %v271 = vld [vmem:[#allocation5 + $0x40] sm:$0xff]
        %v272 = vld [vmem:[#allocation5 + $0x48] sm:$0xff]
        %v273 = vld [vmem:[#allocation5 + $0x50] sm:$0xff]
        %v274 = vld [vmem:[#allocation5 + $0x58] sm:$0xff]
        %v275 = vld [vmem:[#allocation5 + $0x60] sm:$0xff]
        %v276 = vld [vmem:[#allocation5 + $0x68] sm:$0xff]
        %v277 = vld [vmem:[#allocation5 + $0x70] sm:$0xff]
        %v278 = vld [vmem:[#allocation5 + $0x78] sm:$0xff]
        %v279 = vld [vmem:[%s3] sm:$0x1]
        %v280 = vlaneseq
        %v281 = vshrl.u32 %v280, 7
        %v282 = vsub.s32 0, %v281
        %v283 = vrot.slane %v279, %v282
        %284 = vmatprep.subr.mxu0 0.0
        %285 = vmatpush1.msra.mxu0 %v263
        %286 = vmatprep.subr.mxu0 0.0
        %287 = vmatpush1.msra.mxu0 %v264
        %288 = vmatprep.subr.mxu0 0.0
        %289 = vmatpush1.msra.mxu0 %v265
        %290 = vmatprep.subr.mxu0 0.0
        %291 = vmatpush1.msra.mxu0 %v266
        %292 = vmatprep.subr.mxu0 0.0
        %293 = vmatpush1.msra.mxu0 %v267
        %294 = vmatprep.subr.mxu0 0.0
        %295 = vmatpush1.msra.mxu0 %v268
        %296 = vmatprep.subr.mxu0 0.0
        %297 = vmatpush1.msra.mxu0 %v269
        %298 = vmatprep.subr.mxu0 0.0
        %299 = vmatpush1.msra.mxu0 %v270
        %300 = vmatprep.subr.mxu0 0.0
        %301 = vmatpush1.msra.mxu0 %v271
        %302 = vmatprep.subr.mxu0 0.0
        %303 = vmatpush1.msra.mxu0 %v272
        %304 = vmatprep.subr.mxu0 0.0
        %305 = vmatpush1.msra.mxu0 %v273
        %306 = vmatprep.subr.mxu0 0.0
        %307 = vmatpush1.msra.mxu0 %v274
        %308 = vmatprep.subr.mxu0 0.0
        %309 = vmatpush1.msra.mxu0 %v275
        %310 = vmatprep.subr.mxu0 0.0
        %311 = vmatpush1.msra.mxu0 %v276
        %312 = vmatprep.subr.mxu0 0.0
        %313 = vmatpush1.msra.mxu0 %v277
        %314 = vmatprep.subr.mxu0 0.0
        %315 = vmatpush1.msra.mxu0 %v278
        %316 = vmatprep.subr.mxu0 0.0
        %317 = vmatpush1.msra.mxu0 0.0
        %318 = vmatprep.subr.mxu0 0.0
        %319 = vmatpush1.msra.mxu0 0.0
        %320 = vmatprep.subr.mxu0 0.0
        %321 = vmatpush1.msra.mxu0 0.0
        %322 = vmatprep.subr.mxu0 0.0
        %323 = vmatpush1.msra.mxu0 0.0
        %324 = vmatprep.subr.mxu0 0.0
        %325 = vmatpush1.msra.mxu0 0.0
        %326 = vmatprep.subr.mxu0 0.0
        %327 = vmatpush1.msra.mxu0 0.0
        %328 = vmatprep.subr.mxu0 0.0
        %329 = vmatpush1.msra.mxu0 0.0
        %330 = vmatprep.subr.mxu0 0.0
        %331 = vmatpush1.msra.mxu0 0.0
        %332 = vmatprep.subr.mxu0 0.0
        %333 = vmatpush1.msra.mxu0 0.0
        %334 = vmatprep.subr.mxu0 0.0
        %335 = vmatpush1.msra.mxu0 0.0
        %336 = vmatprep.subr.mxu0 0.0
        %337 = vmatpush1.msra.mxu0 0.0
        %338 = vmatprep.subr.mxu0 0.0
        %339 = vmatpush1.msra.mxu0 0.0
        %340 = vmatprep.subr.mxu0 0.0
        %341 = vmatpush1.msra.mxu0 0.0
        %342 = vmatprep.subr.mxu0 0.0
        %343 = vmatpush1.msra.mxu0 0.0
        %344 = vmatprep.subr.mxu0 0.0
        %345 = vmatpush1.msra.mxu0 0.0
        %346 = vmatprep.subr.mxu0 0.0
        %347 = vmatpush1.msra.mxu0 0.0
        %348 = vmatprep.mubr.f32.mxu0 0.0
        %349 = vmatmul.mubr.f32.gmra.mrb[0].mxu0 %v261
        %v350 = vpop.f32.mrb[0].mxu0
        %v351 = vadd.f32 %v283, %v350
        %v352 = vpop.f32.mrb[0].mxu0
        %353 = vmatprep.mubr.f32.mxu0 0.0
        %354 = vmatmul.mubr.f32.gmra.mrb[0].mxu0 %v262
        %v355 = vpop.f32.mrb[0].mxu0
        %v356 = vadd.f32 %v283, %v355
        %v357 = vpop.f32.mrb[0].mxu0
        %358 = vdwg.mxu0
        %359 = vadd.xlane.f32.xlu0 %v351
        %v360 = vpop.xlane.xlu0 %359
        %361 = vadd.xlane.f32.xlu0 %v356
        %v362 = vpop.xlane.xlu0 %361
        %v363 = vrcp.pop 128.0
        %v364 = vmul.f32 %v360, %v363
        %v365 = vmul.f32 %v362, %v363
        %v366 = vsub.f32 %v351, %v364
        %v367 = vsub.f32 %v356, %v365
        %v368 = vmul.f32 %v366, %v366
        %v369 = vmul.f32 %v367, %v367
        %370 = vadd.xlane.f32.xlu0 %v368
        %v371 = vpop.xlane.xlu0 %370
        %372 = vadd.xlane.f32.xlu0 %v369
        %v373 = vpop.xlane.xlu0 %372
        %v374 = vmul.f32 %v371, %v363
        %v375 = vmul.f32 %v373, %v363
        %v376 = vadd.f32 %v374, 1e-05
        %v377 = vadd.f32 %v375, 1e-05
        %v378 = vrsqrt.pop %v376
        %v379 = vrsqrt.pop %v377
        %v380 = vld [vmem:[%s3 + $0x1] sm:$0x1]
        %v381 = vlaneseq
        %v382 = vshrl.u32 %v381, 7
        %v383 = vsub.s32 0, %v382
        %v384 = vrot.slane %v380, %v383
        %v385 = vmul.f32 %v378, %v384
        %v386 = vmul.f32 %v379, %v384
        %v387 = vmul.f32 %v366, %v385
        %v388 = vmul.f32 %v367, %v386
        %v389 = vld [vmem:[%s3 + $0x2] sm:$0x1]
        %v390 = vlaneseq
        %v391 = vshrl.u32 %v390, 7
        %v392 = vsub.s32 0, %v391
        %v393 = vrot.slane %v389, %v392
        %v394 = vadd.f32 %v387, %v393
        %v395 = vadd.f32 %v388, %v393
        %v396 = vmul.f32 %v394, 0.5
        %v397 = vmul.f32 %v395, 0.5
        %v398 = vmul.f32 %v394, 0.70710677
        %v399 = vmul.f32 %v395, 0.70710677
        %v400 = verf.f32.pop %v398
        %v401 = verf.f32.pop %v399
        %v402 = vadd.f32 %v400, 1.0
        %v403 = vadd.f32 %v401, 1.0
        %v404 = vmul.f32 %v396, %v402
        %v405 = vmul.f32 %v397, %v403
        %v406 = vld [vmem:[#allocation7] sm:$0xff]
        %v407 = vld [vmem:[#allocation7 + $0x8] sm:$0xff]
        %v408 = vld [vmem:[#allocation7 + $0x10] sm:$0xff]
        %v409 = vld [vmem:[#allocation7 + $0x18] sm:$0xff]
        %v410 = vld [vmem:[#allocation7 + $0x20] sm:$0xff]
        %v411 = vld [vmem:[#allocation7 + $0x28] sm:$0xff]
        %v412 = vld [vmem:[#allocation7 + $0x30] sm:$0xff]
        %v413 = vld [vmem:[#allocation7 + $0x38] sm:$0xff]
        %v414 = vld [vmem:[#allocation7 + $0x40] sm:$0xff]
        %v415 = vld [vmem:[#allocation7 + $0x48] sm:$0xff]
        %v416 = vld [vmem:[#allocation7 + $0x50] sm:$0xff]
        %v417 = vld [vmem:[#allocation7 + $0x58] sm:$0xff]
        %v418 = vld [vmem:[#allocation7 + $0x60] sm:$0xff]
        %v419 = vld [vmem:[#allocation7 + $0x68] sm:$0xff]
        %v420 = vld [vmem:[#allocation7 + $0x70] sm:$0xff]
        %v421 = vld [vmem:[#allocation7 + $0x78] sm:$0xff]
        %v422 = vld [vmem:[%s3 + $0x3] sm:$0x1]
        %v423 = vlaneseq
        %v424 = vshrl.u32 %v423, 7
        %v425 = vsub.s32 0, %v424
        %v426 = vrot.slane %v422, %v425
        %427 = vmatprep.subr.mxu0 0.0
        %428 = vmatpush1.msra.mxu0 %v406
        %429 = vmatprep.subr.mxu0 0.0
        %430 = vmatpush1.msra.mxu0 %v407
        %431 = vmatprep.subr.mxu0 0.0
        %432 = vmatpush1.msra.mxu0 %v408
        %433 = vmatprep.subr.mxu0 0.0
        %434 = vmatpush1.msra.mxu0 %v409
        %435 = vmatprep.subr.mxu0 0.0
        %436 = vmatpush1.msra.mxu0 %v410
        %437 = vmatprep.subr.mxu0 0.0
        %438 = vmatpush1.msra.mxu0 %v411
        %439 = vmatprep.subr.mxu0 0.0
        %440 = vmatpush1.msra.mxu0 %v412
        %441 = vmatprep.subr.mxu0 0.0
        %442 = vmatpush1.msra.mxu0 %v413
        %443 = vmatprep.subr.mxu0 0.0
        %444 = vmatpush1.msra.mxu0 %v414
        %445 = vmatprep.subr.mxu0 0.0
        %446 = vmatpush1.msra.mxu0 %v415
        %447 = vmatprep.subr.mxu0 0.0
        %448 = vmatpush1.msra.mxu0 %v416
        %449 = vmatprep.subr.mxu0 0.0
        %450 = vmatpush1.msra.mxu0 %v417
        %451 = vmatprep.subr.mxu0 0.0
        %452 = vmatpush1.msra.mxu0 %v418
        %453 = vmatprep.subr.mxu0 0.0
        %454 = vmatpush1.msra.mxu0 %v419
        %455 = vmatprep.subr.mxu0 0.0
        %456 = vmatpush1.msra.mxu0 %v420
        %457 = vmatprep.subr.mxu0 0.0
        %458 = vmatpush1.msra.mxu0 %v421
        %459 = vmatprep.subr.mxu0 0.0
        %460 = vmatpush1.msra.mxu0 0.0
        %461 = vmatprep.subr.mxu0 0.0
        %462 = vmatpush1.msra.mxu0 0.0
        %463 = vmatprep.subr.mxu0 0.0
        %464 = vmatpush1.msra.mxu0 0.0
        %465 = vmatprep.subr.mxu0 0.0
        %466 = vmatpush1.msra.mxu0 0.0
        %467 = vmatprep.subr.mxu0 0.0
        %468 = vmatpush1.msra.mxu0 0.0
        %469 = vmatprep.subr.mxu0 0.0
        %470 = vmatpush1.msra.mxu0 0.0
        %471 = vmatprep.subr.mxu0 0.0
        %472 = vmatpush1.msra.mxu0 0.0
        %473 = vmatprep.subr.mxu0 0.0
        %474 = vmatpush1.msra.mxu0 0.0
        %475 = vmatprep.subr.mxu0 0.0
        %476 = vmatpush1.msra.mxu0 0.0
        %477 = vmatprep.subr.mxu0 0.0
        %478 = vmatpush1.msra.mxu0 0.0
        %479 = vmatprep.subr.mxu0 0.0
        %480 = vmatpush1.msra.mxu0 0.0
        %481 = vmatprep.subr.mxu0 0.0
        %482 = vmatpush1.msra.mxu0 0.0
        %483 = vmatprep.subr.mxu0 0.0
        %484 = vmatpush1.msra.mxu0 0.0
        %485 = vmatprep.subr.mxu0 0.0
        %486 = vmatpush1.msra.mxu0 0.0
        %487 = vmatprep.subr.mxu0 0.0
        %488 = vmatpush1.msra.mxu0 0.0
        %489 = vmatprep.subr.mxu0 0.0
        %490 = vmatpush1.msra.mxu0 0.0
        %491 = vmatprep.mubr.f32.mxu0 0.0
        %492 = vmatmul.mubr.f32.gmra.mrb[0].mxu0 %v404
        %v493 = vpop.f32.mrb[0].mxu0
        %v494 = vadd.f32 %v426, %v493
        %v495 = vpop.f32.mrb[0].mxu0
        %496 = vmatprep.mubr.f32.mxu0 0.0
        %497 = vmatmul.mubr.f32.gmra.mrb[0].mxu0 %v405
        %v498 = vpop.f32.mrb[0].mxu0
        %v499 = vadd.f32 %v426, %v498
        %v500 = vpop.f32.mrb[0].mxu0
        %501 = vdwg.mxu0
        %502 = vadd.xlane.f32.xlu0 %v494
        %v503 = vpop.xlane.xlu0 %502
        %504 = vadd.xlane.f32.xlu0 %v499
        %v505 = vpop.xlane.xlu0 %504
        %v506 = vmul.f32 %v503, %v363
        %v507 = vmul.f32 %v505, %v363
        %v508 = vsub.f32 %v494, %v506
        %v509 = vsub.f32 %v499, %v507
        %v510 = vmul.f32 %v508, %v508
        %v511 = vmul.f32 %v509, %v509
        %512 = vadd.xlane.f32.xlu0 %v510
        %v513 = vpop.xlane.xlu0 %512
        %514 = vadd.xlane.f32.xlu0 %v511
        %v515 = vpop.xlane.xlu0 %514
        %v516 = vmul.f32 %v513, %v363
        %v517 = vmul.f32 %v515, %v363
        %v518 = vadd.f32 %v516, 1e-05
        %v519 = vadd.f32 %v517, 1e-05
        %v520 = vrsqrt.pop %v518
        %v521 = vrsqrt.pop %v519
        %v522 = vld [vmem:[%s3 + $0x4] sm:$0x1]
        %v523 = vlaneseq
        %v524 = vshrl.u32 %v523, 7
        %v525 = vsub.s32 0, %v524
        %v526 = vrot.slane %v522, %v525
        %v527 = vmul.f32 %v520, %v526
        %v528 = vmul.f32 %v521, %v526
        %v529 = vmul.f32 %v508, %v527
        %v530 = vmul.f32 %v509, %v528
        %v531 = vld [vmem:[%s3 + $0x5] sm:$0x1]
        %v532 = vlaneseq
        %v533 = vshrl.u32 %v532, 7
        %v534 = vsub.s32 0, %v533
        %v535 = vrot.slane %v531, %v534
        %v536 = vadd.f32 %v529, %v535
        %v537 = vadd.f32 %v530, %v535
        %v538 = vadd.f32 %v261, %v536
        %v539 = vadd.f32 %v262, %v537
        %540 = vst [vmem:[%s250] sm:$0xff] %v538
        %541 = vst [vmem:[%s250 + $0x8] sm:$0xff] %v539
        %s542 = sand.u32 %s119, 1
        %s543 = scalar_lea.sflag [#allocation4], %s542
        %s544 = sand.u32 %s119, 1
        %s545 = smul.addr %s544, 16
        %s546 = scalar_lea.vmem [#allocation8], %s545
        // Predicated region
        $region49: #{tpu_custom_call.1} parent=35 // pred_check
          %p547 = pneg %p129
        $region50: #{tpu_custom_call.1} parent=35 // pred_check_branch
          %549 = sbr.rel (%p547) target = $region52
        $region51: #{tpu_custom_call.1} parent=35 // pred_region
          %s550 = smul.u32 2, %s22
          %s551 = ssub.s32 3, %s550
          %p552 = scmp.lt.s32.totalorder %s551, 2
          %s553 = scalar_select %p552, %s551, 2
          %s554 = smul.u32 128, %s553
          %s556 = ssub.s32 256, %s554
          %557 = vsyncadd %s543, %s556
          %p558 = scmp.ne.s32.totalorder 0, %s554
          %s559 = smul.addr %s550, 128
          %s560 = scalar_lea.hbm %s4, %s559
          %s561 = smul.u32 8, %s553
          %s562 = sshll.u32 %s546, 4
          %s563 = int_to_ptr.vmem [resolvable:$true] %s562
          %s564 = sshll.u32 %s561, 4
          %568 = dma.vmem_to_hbm [thread:$0]  (%p558), %s563, %s564, %s560, %s543, 128, 128, 8
        $region52: #{tpu_custom_call.1} parent=35 // pred_fallthru
          _
      $region36: #{tpu_custom_call.1} parent=5 // pred_fallthru
        _
      %p569 = scmp.le.s32.totalorder 2, %s17
      // Predicated region
      $region53: #{tpu_custom_call.1} parent=5 // pred_check
        %p570 = pneg %p569
      $region54: #{tpu_custom_call.1} parent=5 // pred_check_branch
        %572 = sbr.rel (%p570) target = $region56
      $region55: #{tpu_custom_call.1} parent=5 // pred_region
        %s573 = ssub.s32 %s17, 2
        // Predicated region
        $region57: #{tpu_custom_call.1} parent=55 // pred_check
          %p574 = pneg %p135
        $region58: #{tpu_custom_call.1} parent=55 // pred_check_branch
          %576 = sbr.rel (%p574) target = $region60
        $region59: #{tpu_custom_call.1} parent=55 // pred_region
          %s577 = sand.u32 %s120, 1
          %s578 = scalar_lea.sflag [#allocation4], %s577
          %s579 = sand.u32 %s120, 1
          %s580 = smul.addr %s579, 16
          %s581 = scalar_lea.vmem [#allocation8], %s580
          %582 = dma.done %s578, 256
        $region60: #{tpu_custom_call.1} parent=55 // pred_fallthru
          _
      $region56: #{tpu_custom_call.1} parent=5 // pred_fallthru
        _
    $region6: #{tpu_custom_call.1} parent=1 // loop_footer
      %s21 = sadd.s32 1, %s17
    $region7: #{tpu_custom_call.1} parent=1 // loop_footer_branch
      %16 = sbr.rel target = $region3
    $region8: #{tpu_custom_call.1} parent=1 // loop_exit
      _
    %583 = vsyncpa [#allocation3], 1
    %s584 = scalar_lea.sflag [#allocation3], 1
    %585 = vsyncpa %s584, 1
    %586 = vsyncpa [#allocation6], 1
    %587 = vsyncpa [#allocation4], 1
    %s588 = scalar_lea.sflag [#allocation4], 1
    %589 = vsyncpa %s588, 1

</llo_original>
